<compile_context>
chip_gen: v7x
topology: tpu7x:2x2x1
jax: 0.10.0
libtpu: 0.0.40
codegen_flags: <defaults>
</compile_context>

<pallas_src>
import jax
import jax.numpy as jnp
from jax.experimental import pallas as pl
from jax.experimental.pallas import tpu as pltpu

IMG_FEAT = 384
EMB_DIM = 128
NUM_EMB = 190
NUM_CLASSES = 340
NUM_CLASSES_PAD = 384          # 3 * 128 -> lane-dense output stores
NEG_INF = -1e30                # finite "minus infinity" for padded class lanes


def _round_up(x, m):
    return (x + m - 1) // m * m


def _pick_tm(b):
    """Batch-tile rows: big tiles for big batches (amortize w_img streaming),
    but keep >=2 batch tiles whenever possible so both v7x TCs get work."""
    b16 = _round_up(b, 16)         # bf16 packs (16,128) per vreg -> 16-row floor
    if b16 <= 16:
        return 16
    if b16 >= 1024:
        return 512
    if b16 >= 512:
        return 256
    return max(16, _round_up(b16 // 2, 16))


def _pick_tk(chw):
    """Keep the whole K dim resident when it fits; otherwise 2048-wide tiles."""
    return min(2048, _round_up(chw, 256))


def _vmem_limit_bytes(tm, tk):
    """Budget VMEM from the actual double-buffered footprint (+ headroom),
    clamped to a ceiling that is safe on v7x (64 MiB physical)."""
    per_step = (tm * tk * 2                          # img tile, bf16
                + tk * IMG_FEAT * 2                  # w_img K-slice, bf16
                + tm * NUM_CLASSES_PAD * 4           # cc_bias rows, f32
                + IMG_FEAT * NUM_CLASSES_PAD * 2     # fc weight (img half), bf16
                + tm * NUM_CLASSES_PAD * 4)          # output tile, f32
    total = per_step * 2 + tm * IMG_FEAT * 4         # x2 buffers + f32 accumulator
    budget = total * 3 // 2 + (4 << 20)              # headroom for compiler scratch
    return int(min(max(budget, 16 << 20), 40 << 20))


def drawing_classifier_kernel(img_ref, w_img_ref, cc_bias_ref, w_fc_img_ref,
                              out_ref, acc_ref):
    k = pl.program_id(1)

    @pl.when(k == 0)
    def _():
        acc_ref[...] = jnp.zeros_like(acc_ref)

    # img_net partial product: (tm, tk)bf16 @ (tk, 384)bf16 -> f32 accumulator.
    acc_ref[...] += jnp.dot(img_ref[...], w_img_ref[...],
                            preferred_element_type=jnp.float32)

    @pl.when(k == pl.num_programs(1) - 1)
    def _():
        # Single epilogue MXU call; cc/bias contribution was precomputed per row
        # (cc_bias already carries -1e30 in the padded class lanes).
        logits = jnp.dot(acc_ref[...].astype(jnp.bfloat16), w_fc_img_ref[...],
                         preferred_element_type=jnp.float32)
        logits += cc_bias_ref[...]

        # numerically-stable log_softmax along the lane axis (f32)
        m = jnp.max(logits, axis=-1, keepdims=True)
        shifted = logits - m
        lse = jnp.log(jnp.sum(jnp.exp(shifted), axis=-1, keepdims=True))
        out_ref[...] = shifted - lse


def drawing_classifier_forward(img, cc, params):
    """img: (B, C, H, W) float32, cc: (B,) int32 class-code indices."""
    B = img.shape[0]
    img_flat = img.reshape(B, -1).astype(jnp.float32)           # (B, C*H*W)
    chw = img_flat.shape[1]

    # Embedding lookup kept as plain-JAX glue (gather).
    # TODO(synk): could be fused via num_scalar_prefetch=1 + pl.Element gather.
    cc_emb = jnp.take(params["emb_table"], cc, axis=0)          # (B, 128) f32

    w_fc_img = params["w_fc"][:IMG_FEAT]                        # (384, 340)
    w_fc_cc = params["w_fc"][IMG_FEAT:]                         # (128, 340)
    # Everything that does not depend on the streamed image pixels is folded
    # into a per-row bias (cc embedding half of fc, fc bias, img_net bias).
    cc_bias = (cc_emb @ w_fc_cc
               + params["b_fc"]
               + params["b_img"] @ w_fc_img)                    # (B, 340) f32

    tm = _pick_tm(B)
    b_pad = _round_up(B, tm)
    tk = _pick_tk(chw)
    chw_pad = _round_up(chw, tk)

    # Pad + cast streaming operands to bf16 (f32 accumulation inside the kernel).
    img_p = jnp.pad(img_flat.astype(jnp.bfloat16),
                    ((0, b_pad - B), (0, chw_pad - chw)))
    w_img_p = jnp.pad(params["w_img"].astype(jnp.bfloat16),
                      ((0, chw_pad - chw), (0, 0)))
    w_fc_img_p = jnp.pad(w_fc_img.astype(jnp.bfloat16),
                         ((0, 0), (0, NUM_CLASSES_PAD - NUM_CLASSES)))
    # Padded class lanes (and padded batch rows) get -1e30 so they never affect
    # the softmax normalization; replaces the in-kernel iota/where mask.
    cc_bias_p = jnp.pad(cc_bias.astype(jnp.float32),
                        ((0, b_pad - B), (0, NUM_CLASSES_PAD - NUM_CLASSES)),
                        constant_values=NEG_INF)

    grid = (b_pad // tm, chw_pad // tk)
    n_b_tiles = grid[0]

    flops = 2 * b_pad * (chw_pad * IMG_FEAT + IMG_FEAT * NUM_CLASSES_PAD)
    bytes_accessed = (img_p.size * 2
                      + w_img_p.size * 2 * n_b_tiles   # re-streamed per batch tile
                      + cc_bias_p.size * 4
                      + w_fc_img_p.size * 2
                      + b_pad * NUM_CLASSES_PAD * 4)
    cost = pl.CostEstimate(flops=flops,
                           transcendentals=b_pad * NUM_CLASSES_PAD,
                           bytes_accessed=bytes_accessed)

    out_padded = pl.pallas_call(
        drawing_classifier_kernel,
        out_shape=jax.ShapeDtypeStruct((b_pad, NUM_CLASSES_PAD), jnp.float32),
        grid_spec=pltpu.PrefetchScalarGridSpec(
            num_scalar_prefetch=0,
            grid=grid,
            in_specs=[
                pl.BlockSpec((tm, tk), lambda i, k: (i, k)),             # img tile
                pl.BlockSpec((tk, IMG_FEAT), lambda i, k: (k, 0)),       # w_img K-slice
                pl.BlockSpec((tm, NUM_CLASSES_PAD), lambda i, k: (i, 0)),  # per-row bias
                pl.BlockSpec((IMG_FEAT, NUM_CLASSES_PAD),
                             lambda i, k: (0, 0)),                       # fc weight (img half), resident
            ],
            out_specs=pl.BlockSpec((tm, NUM_CLASSES_PAD), lambda i, k: (i, 0)),
            scratch_shapes=[pltpu.VMEM((tm, IMG_FEAT), jnp.float32)],
        ),
        compiler_params=pltpu.CompilerParams(
            dimension_semantics=("parallel", "arbitrary"),
            vmem_limit_bytes=_vmem_limit_bytes(tm, tk)),
        cost_estimate=cost,
    )(img_p, w_img_p, cc_bias_p, w_fc_img_p)

    return out_padded[:B, :NUM_CLASSES]


def reference_forward(img, cc, params):
    """Pure-JAX f32 reference matching the PyTorch module."""
    B = img.shape[0]
    img_flat = img.reshape(B, -1)
    feats = img_flat @ params["w_img"] + params["b_img"]
    cc_emb = jnp.take(params["emb_table"], cc, axis=0)
    x = jnp.concatenate([feats, cc_emb], axis=1)
    logits = x @ params["w_fc"] + params["b_fc"]
    return jax.nn.log_softmax(logits, axis=-1)


def init_params(key, chw):
    k0, k1, k2, k3 = jax.random.split(key, 4)
    return {
        # synthetic img_net: Linear(C*H*W -> 384)
        "w_img": jax.random.normal(k0, (chw, IMG_FEAT), jnp.float32) * 0.02,
        "b_img": jnp.zeros((1, IMG_FEAT), jnp.float32),
        # nn.Embedding(190, 128)
        "emb_table": jax.random.normal(k1, (NUM_EMB, EMB_DIM), jnp.float32),
        # nn.Linear(384 + 128, 340, bias=True)
        "w_fc": jax.random.normal(k2, (IMG_FEAT + EMB_DIM, NUM_CLASSES),
                                  jnp.float32) * 0.02,
        "b_fc": jax.random.normal(k3, (1, NUM_CLASSES), jnp.float32) * 0.01,
    }


if __name__ == "__main__":
    B, C, H, W = 2, 4, 16, 16
    key = jax.random.PRNGKey(0)
    k_img, k_cc, k_par = jax.random.split(key, 3)

    img = jax.random.normal(k_img, (B, C, H, W), jnp.float32)
    cc = jax.random.randint(k_cc, (B,), 0, NUM_EMB, dtype=jnp.int32)
    params = init_params(k_par, C * H * W)

    out = drawing_classifier_forward(img, cc, params)
    out = jax.block_until_ready(out)

    # sanity: shape, rows sum to 1 in probability space, close to f32 reference
    assert out.shape == (B, NUM_CLASSES)
    assert bool(jnp.all(jnp.isfinite(out)))
    assert jnp.allclose(jnp.sum(jnp.exp(out), axis=-1), 1.0, atol=1e-3)
    ref = reference_forward(img, cc, params)
    assert float(jnp.max(jnp.abs(out - ref))) < 1e-1  # bf16-operand tolerance
    print("KERNEL_OK")
</pallas_src>

<mosaic_0001>
module attributes {stable_mosaic.version = 11 : i64} {
  func.func @drawing_classifier_kernel(%arg0: i32, %arg1: i32, %arg2: memref<16x1024xbf16, #tpu.memory_space<vmem>>, %arg3: memref<1024x384xbf16, #tpu.memory_space<vmem>>, %arg4: memref<16x384xf32, #tpu.memory_space<vmem>>, %arg5: memref<384x384xbf16, #tpu.memory_space<vmem>>, %arg6: memref<16x384xf32, #tpu.memory_space<vmem>>, %arg7: memref<16x384xf32, #tpu.memory_space<vmem>>) attributes {dimension_semantics = [#tpu.dimension_semantics<parallel>, #tpu.dimension_semantics<arbitrary>], iteration_bounds = array<i64: 1, 1>, scalar_prefetch = 0 : i64, scratch_operands = 1 : i64, tpu.core_type = #tpu.core_type<tc>, window_params = [{transform_indices = @transform_0, window_bounds = array<i64: 16, 1024>}, {transform_indices = @transform_1, window_bounds = array<i64: 1024, 384>}, {transform_indices = @transform_2, window_bounds = array<i64: 16, 384>}, {pipeline_mode = #tpu.pipeline_mode<synchronous>, transform_indices = @transform_3, window_bounds = array<i64: 384, 384>}, {transform_indices = @transform_4, window_bounds = array<i64: 16, 384>}]} {
    %c0_i32 = arith.constant 0 : i32
    %0 = arith.cmpi eq, %arg1, %c0_i32 : i32
    %1 = arith.extui %0 : i1 to i32
    %c0_i32_0 = arith.constant 0 : i32
    %2 = arith.cmpi ne, %1, %c0_i32_0 : i32
    scf.if %2 {
      %cst_10 = arith.constant 0.000000e+00 : f32
      %12 = vector.broadcast %cst_10 : f32 to vector<16x384xf32>
      %c0_11 = arith.constant 0 : index
      %c0_12 = arith.constant 0 : index
      %13 = vector.load %arg7[%c0_11, %c0_12] : memref<16x384xf32, #tpu.memory_space<vmem>>, vector<16x384xf32>
      tpu.vector_store %arg7[%c0_11, %c0_12], %12 {strides = array<i32>} : memref<16x384xf32, #tpu.memory_space<vmem>>, vector<16x384xf32>,
    } else {
    }
    %c0 = arith.constant 0 : index
    %c0_1 = arith.constant 0 : index
    %3 = vector.load %arg7[%c0, %c0_1] : memref<16x384xf32, #tpu.memory_space<vmem>>, vector<16x384xf32>
    %c0_2 = arith.constant 0 : index
    %c0_3 = arith.constant 0 : index
    %4 = vector.load %arg2[%c0_2, %c0_3] : memref<16x1024xbf16, #tpu.memory_space<vmem>>, vector<16x1024xbf16>
    %c0_4 = arith.constant 0 : index
    %c0_5 = arith.constant 0 : index
    %5 = vector.load %arg3[%c0_4, %c0_5] : memref<1024x384xbf16, #tpu.memory_space<vmem>>, vector<1024x384xbf16>
    %cst = arith.constant dense<0.000000e+00> : vector<16x384xf32>
    %6 = tpu.matmul %4, %5, %cst {dimension_numbers = #tpu.dot_dimension_numbers<[1], [0], [0], [1], [0, 0, 1, 1], [], []>} : vector<16x1024xbf16>, vector<1024x384xbf16>, vector<16x384xf32> -> vector<16x384xf32>
    %7 = arith.addf %3, %6 : vector<16x384xf32>
    %c0_6 = arith.constant 0 : index
    %c0_7 = arith.constant 0 : index
    %8 = vector.load %arg7[%c0_6, %c0_7] : memref<16x384xf32, #tpu.memory_space<vmem>>, vector<16x384xf32>
    tpu.vector_store %arg7[%c0_6, %c0_7], %7 {strides = array<i32>} : memref<16x384xf32, #tpu.memory_space<vmem>>, vector<16x384xf32>,
    %c0_i32_8 = arith.constant 0 : i32
    %9 = arith.cmpi eq, %arg1, %c0_i32_8 : i32
    %10 = arith.extui %9 : i1 to i32
    %c0_i32_9 = arith.constant 0 : i32
    %11 = arith.cmpi ne, %10, %c0_i32_9 : i32
    scf.if %11 {
      %c0_10 = arith.constant 0 : index
      %c0_11 = arith.constant 0 : index
      %12 = vector.load %arg7[%c0_10, %c0_11] : memref<16x384xf32, #tpu.memory_space<vmem>>, vector<16x384xf32>
      %13 = arith.truncf %12 : vector<16x384xf32> to vector<16x384xbf16>
      %c0_12 = arith.constant 0 : index
      %c0_13 = arith.constant 0 : index
      %14 = vector.load %arg5[%c0_12, %c0_13] : memref<384x384xbf16, #tpu.memory_space<vmem>>, vector<384x384xbf16>
      %cst_14 = arith.constant dense<0.000000e+00> : vector<16x384xf32>
      %15 = tpu.matmul %13, %14, %cst_14 {dimension_numbers = #tpu.dot_dimension_numbers<[1], [0], [0], [1], [0, 0, 1, 1], [], []>} : vector<16x384xbf16>, vector<384x384xbf16>, vector<16x384xf32> -> vector<16x384xf32>
      %c0_15 = arith.constant 0 : index
      %c0_16 = arith.constant 0 : index
      %16 = vector.load %arg4[%c0_15, %c0_16] : memref<16x384xf32, #tpu.memory_space<vmem>>, vector<16x384xf32>
      %17 = arith.addf %15, %16 : vector<16x384xf32>
      %cst_17 = arith.constant dense<0xFF800000> : vector<16xf32>
      %18 = vector.multi_reduction <maximumf>, %17, %cst_17 [1] : vector<16x384xf32> to vector<16xf32>
      %19 = vector.shape_cast %18 : vector<16xf32> to vector<16x1xf32>
      %20 = vector.broadcast %19 : vector<16x1xf32> to vector<16x384xf32>
      %21 = arith.subf %17, %20 : vector<16x384xf32>
      %22 = math.exp %21 : vector<16x384xf32>
      %cst_18 = arith.constant dense<0.000000e+00> : vector<16xf32>
      %23 = vector.multi_reduction <add>, %22, %cst_18 [1] : vector<16x384xf32> to vector<16xf32>
      %24 = vector.shape_cast %23 : vector<16xf32> to vector<16x1xf32>
      %25 = math.log %24 : vector<16x1xf32>
      %26 = vector.broadcast %25 : vector<16x1xf32> to vector<16x384xf32>
      %27 = arith.subf %21, %26 : vector<16x384xf32>
      %c0_19 = arith.constant 0 : index
      %c0_20 = arith.constant 0 : index
      %28 = vector.load %arg6[%c0_19, %c0_20] : memref<16x384xf32, #tpu.memory_space<vmem>>, vector<16x384xf32>
      tpu.vector_store %arg6[%c0_19, %c0_20], %27 {strides = array<i32>} : memref<16x384xf32, #tpu.memory_space<vmem>>, vector<16x384xf32>,
    } else {
    }
    return
  }
  func.func @transform_0(%arg0: i32, %arg1: i32) -> (i32, i32) {
    %c0_i32 = arith.constant 0 : i32
    return %arg0, %arg1 : i32, i32
  }
  func.func @transform_1(%arg0: i32, %arg1: i32) -> (i32, i32) {
    %c0_i32 = arith.constant 0 : i32
    %c0_i32_0 = arith.constant 0 : i32
    return %arg1, %c0_i32 : i32, i32
  }
  func.func @transform_2(%arg0: i32, %arg1: i32) -> (i32, i32) {
    %c0_i32 = arith.constant 0 : i32
    %c0_i32_0 = arith.constant 0 : i32
    return %arg0, %c0_i32 : i32, i32
  }
  func.func @transform_3(%arg0: i32, %arg1: i32) -> (i32, i32) {
    %c0_i32 = arith.constant 0 : i32
    %c0_i32_0 = arith.constant 0 : i32
    %c0_i32_1 = arith.constant 0 : i32
    return %c0_i32, %c0_i32_0 : i32, i32
  }
  func.func @transform_4(%arg0: i32, %arg1: i32) -> (i32, i32) {
    %c0_i32 = arith.constant 0 : i32
    %c0_i32_0 = arith.constant 0 : i32
    return %arg0, %c0_i32 : i32, i32
  }
}

</mosaic_0001>

<llo_original>
// kernel: tpu_custom_call.1
$region0: #{tpu_custom_call.1}
  #allocation0 [shape = 'u32[]', space=smem, size = 0x4, offset = 0x4, fixed_abs, tag = 'smem constant byte address 0x4 - core index']
  #allocation1 [shape = 'u32[144,128]{1,0:T(1,128)}', space=vmem, size = 0x12000, scoped, tag = 'internal scratch']
  #allocation2 [shape = 'f32[16,384]{1,0:T(8,128)}', space=vmem, size = 0x6000, scoped, tag = 'scratch operand']
  %s0 = inlined_call_operand.hbm [shape: bf16[16,1024], index: 0, kind: input, shape index: {}]
  %s1 = inlined_call_operand.hbm [shape: bf16[1024,384], index: 1, kind: input, shape index: {}]
  %s2 = inlined_call_operand.hbm [shape: f32[16,384], index: 2, kind: input, shape index: {}]
  %s3 = inlined_call_operand.hbm [shape: bf16[384,384], index: 3, kind: input, shape index: {}]
  %s4 = inlined_call_operand.hbm [shape: f32[16,384], index: 4, kind: output, shape index: {}]
  %s5 = sld [smem:[#allocation0]]
  $region50: #{tpu_custom_call.1} parent=0
    _
  %s7 = ssub.s32 1, %s5
  %s8 = scalar_select 0, %s7, %s5
  $region1: #{tpu_custom_call.1} parent=0
    #allocation3 [shape = 'u8[32768]{0}', space=vmem, size = 0x8000, scoped, tag = 'input window, operand 0, single buffered']
    #allocation4 [shape = 's32[1]{0}', space=sflag, size = 0x4, scoped, tag = 'scoped memory for tpu_custom_call.1']
    #allocation5 [shape = 's32[1]{0}', space=sflag, size = 0x4, scoped, tag = 'scoped memory for tpu_custom_call.1']
    #allocation6 [shape = 'u8[786432]{0}', space=vmem, size = 0xc0000, scoped, tag = 'input window, operand 1, single buffered']
    #allocation7 [shape = 's32[1]{0}', space=sflag, size = 0x4, scoped, tag = 'scoped memory for tpu_custom_call.1']
    #allocation8 [shape = 'u8[24576]{0}', space=vmem, size = 0x6000, scoped, tag = 'input window, operand 2, single buffered']
    #allocation9 [shape = 'u8[294912]{0}', space=vmem, size = 0x48000, scoped, tag = 'input window, operand 3, single buffered']
    #allocation10 [shape = 's32[1]{0}', space=sflag, size = 0x4, scoped, tag = 'scoped memory for tpu_custom_call.1']
    #allocation11 [shape = 'u8[24576]{0}', space=vmem, size = 0x6000, scoped, tag = 'output window, operand 0, single buffered']
    %9 = vsyncpa [#allocation4], 0
    %10 = vsyncpa [#allocation7], 0
    %11 = vsyncpa [#allocation10], 0
    %12 = vsyncpa [#allocation5], 0
    // Predicated region
    $region2: #{tpu_custom_call.1} parent=1 // pred_check
      _
    $region3: #{tpu_custom_call.1} parent=1 // pred_check_branch
      %14 = sbr.rel (0) target = $region5
    $region4: #{tpu_custom_call.1} parent=1 // pred_region
      %s16 = ssub.s32 1024, 1024
      %17 = vsyncadd [#allocation4], %s16
      %s18 = sshll.u32 [#allocation3], 4
      %s19 = int_to_ptr.vmem [resolvable:$true] %s18
      %24 = dma.hbm_to_vmem [thread:$0]  %s0, 1024, %s19, [#allocation4], 512, 512, 32
    $region5: #{tpu_custom_call.1} parent=1 // pred_fallthru
      _
    // Predicated region
    $region6: #{tpu_custom_call.1} parent=1 // pred_check
      _
    $region7: #{tpu_custom_call.1} parent=1 // pred_check_branch
      %26 = sbr.rel (0) target = $region9
    $region8: #{tpu_custom_call.1} parent=1 // pred_region
      %s28 = ssub.s32 24576, 24576
      %29 = vsyncadd [#allocation7], %s28
      %s30 = sshll.u32 [#allocation6], 4
      %s31 = int_to_ptr.vmem [resolvable:$true] %s30
      %36 = dma.hbm_to_vmem [thread:$0]  %s1, 24576, %s31, [#allocation7], 192, 192, 12
    $region9: #{tpu_custom_call.1} parent=1 // pred_fallthru
      _
    // Predicated region
    $region10: #{tpu_custom_call.1} parent=1 // pred_check
      _
    $region11: #{tpu_custom_call.1} parent=1 // pred_check_branch
      %38 = sbr.rel (0) target = $region13
    $region12: #{tpu_custom_call.1} parent=1 // pred_region
      %s40 = ssub.s32 768, 768
      %41 = vsyncadd [#allocation7], %s40
      %s42 = sshll.u32 [#allocation8], 4
      %s43 = int_to_ptr.vmem [resolvable:$true] %s42
      %48 = dma.hbm_to_vmem [thread:$0]  %s2, 768, %s43, [#allocation7], 384, 384, 24
    $region13: #{tpu_custom_call.1} parent=1 // pred_fallthru
      _
    // Predicated region
    $region14: #{tpu_custom_call.1} parent=1 // pred_check
      _
    $region15: #{tpu_custom_call.1} parent=1 // pred_check_branch
      %50 = sbr.rel (0) target = $region17
    $region16: #{tpu_custom_call.1} parent=1 // pred_region
      %s52 = ssub.s32 9216, 9216
      %53 = vsyncadd [#allocation10], %s52
      %s54 = sshll.u32 [#allocation9], 4
      %s55 = int_to_ptr.vmem [resolvable:$true] %s54
      %60 = dma.hbm_to_vmem [thread:$0]  %s3, 9216, %s55, [#allocation10], 192, 192, 12
    $region17: #{tpu_custom_call.1} parent=1 // pred_fallthru
      _
    // Predicated region
    $region18: #{tpu_custom_call.1} parent=1 // pred_check
      _
    $region19: #{tpu_custom_call.1} parent=1 // pred_check_branch
      %62 = sbr.rel (0) target = $region21
    $region20: #{tpu_custom_call.1} parent=1 // pred_region
      %63 = dma.done [#allocation4], 1024
    $region21: #{tpu_custom_call.1} parent=1 // pred_fallthru
      _
    // Predicated region
    $region22: #{tpu_custom_call.1} parent=1 // pred_check
      _
    $region23: #{tpu_custom_call.1} parent=1 // pred_check_branch
      %65 = sbr.rel (0) target = $region25
    $region24: #{tpu_custom_call.1} parent=1 // pred_region
      %66 = dma.done [#allocation7], 24576
    $region25: #{tpu_custom_call.1} parent=1 // pred_fallthru
      _
    // Predicated region
    $region26: #{tpu_custom_call.1} parent=1 // pred_check
      _
    $region27: #{tpu_custom_call.1} parent=1 // pred_check_branch
      %68 = sbr.rel (0) target = $region29
    $region28: #{tpu_custom_call.1} parent=1 // pred_region
      %69 = dma.done [#allocation7], 768
    $region29: #{tpu_custom_call.1} parent=1 // pred_fallthru
      _
    // Predicated region
    $region30: #{tpu_custom_call.1} parent=1 // pred_check
      _
    $region31: #{tpu_custom_call.1} parent=1 // pred_check_branch
      %71 = sbr.rel (0) target = $region33
    $region32: #{tpu_custom_call.1} parent=1 // pred_region
      %72 = dma.done [#allocation10], 9216
    $region33: #{tpu_custom_call.1} parent=1 // pred_fallthru
      _
    %p74 = scmp.eq.s32.totalorder 0, 0
    // Predicated region
    $region34: #{tpu_custom_call.1} parent=1 // pred_check
      %p75 = pneg %p74
    $region35: #{tpu_custom_call.1} parent=1 // pred_check_branch
      %77 = sbr.rel (%p75) target = $region37
    $region36: #{tpu_custom_call.1} parent=1 // pred_region
      %78 = vst [vmem:[#allocation2] sm:$0xff] 0.0
      %79 = vst [vmem:[#allocation2 + $0x8] sm:$0xff] 0.0
      %80 = vst [vmem:[#allocation2 + $0x10] sm:$0xff] 0.0
      %81 = vst [vmem:[#allocation2 + $0x18] sm:$0xff] 0.0
      %82 = vst [vmem:[#allocation2 + $0x20] sm:$0xff] 0.0
      %83 = vst [vmem:[#allocation2 + $0x28] sm:$0xff] 0.0
    $region37: #{tpu_custom_call.1} parent=1 // pred_fallthru
      _
    %v84 = vld [vmem:[#allocation2] sm:$0xff]
    %v85 = vld [vmem:[#allocation2 + $0x8] sm:$0xff]
    %v86 = vld [vmem:[#allocation2 + $0x10] sm:$0xff]
    %v87 = vld [vmem:[#allocation2 + $0x18] sm:$0xff]
    %v88 = vld [vmem:[#allocation2 + $0x20] sm:$0xff]
    %v89 = vld [vmem:[#allocation2 + $0x28] sm:$0xff]
    %v90 = vld [vmem:[#allocation3] sm:$0xff]
    %v91 = vld [vmem:[#allocation3 + $0x8] sm:$0xff]
    %v92 = vld [vmem:[#allocation3 + $0x10] sm:$0xff]
    %v93 = vld [vmem:[#allocation3 + $0x18] sm:$0xff]
    %v94 = vld [vmem:[#allocation3 + $0x20] sm:$0xff]
    %v95 = vld [vmem:[#allocation3 + $0x28] sm:$0xff]
    %v96 = vld [vmem:[#allocation3 + $0x30] sm:$0xff]
    %v97 = vld [vmem:[#allocation3 + $0x38] sm:$0xff]
    %v98 = vld [vmem:[#allocation6] sm:$0xff]
    %v99 = vld [vmem:[#allocation6 + $0x8] sm:$0xf]
    %v100 = vld [vmem:[#allocation6 + $0xc] sm:$0xff]
    %v101 = vld [vmem:[#allocation6 + $0x14] sm:$0xf]
    %v102 = vld [vmem:[#allocation6 + $0x18] sm:$0xff]
    %v103 = vld [vmem:[#allocation6 + $0x20] sm:$0xf]
    %v104 = vld [vmem:[#allocation6 + $0x24] sm:$0xff]
    %v105 = vld [vmem:[#allocation6 + $0x2c] sm:$0xf]
    %v106 = vld [vmem:[#allocation6 + $0x30] sm:$0xff]
    %v107 = vld [vmem:[#allocation6 + $0x38] sm:$0xf]
    %v108 = vld [vmem:[#allocation6 + $0x3c] sm:$0xff]
    %v109 = vld [vmem:[#allocation6 + $0x44] sm:$0xf]
    %v110 = vld [vmem:[#allocation6 + $0x48] sm:$0xff]
    %v111 = vld [vmem:[#allocation6 + $0x50] sm:$0xf]
    %v112 = vld [vmem:[#allocation6 + $0x54] sm:$0xff]
    %v113 = vld [vmem:[#allocation6 + $0x5c] sm:$0xf]
    %v114 = vld [vmem:[#allocation6 + $0x60] sm:$0xff]
    %v115 = vld [vmem:[#allocation6 + $0x68] sm:$0xf]
    %v116 = vld [vmem:[#allocation6 + $0x6c] sm:$0xff]
    %v117 = vld [vmem:[#allocation6 + $0x74] sm:$0xf]
    %v118 = vld [vmem:[#allocation6 + $0x78] sm:$0xff]
    %v119 = vld [vmem:[#allocation6 + $0x80] sm:$0xf]
    %v120 = vld [vmem:[#allocation6 + $0x84] sm:$0xff]
    %v121 = vld [vmem:[#allocation6 + $0x8c] sm:$0xf]
    %v122 = vld [vmem:[#allocation6 + $0x90] sm:$0xff]
    %v123 = vld [vmem:[#allocation6 + $0x98] sm:$0xf]
    %v124 = vld [vmem:[#allocation6 + $0x9c] sm:$0xff]
    %v125 = vld [vmem:[#allocation6 + $0xa4] sm:$0xf]
    %v126 = vld [vmem:[#allocation6 + $0xa8] sm:$0xff]
    %v127 = vld [vmem:[#allocation6 + $0xb0] sm:$0xf]
    %v128 = vld [vmem:[#allocation6 + $0xb4] sm:$0xff]
    %v129 = vld [vmem:[#allocation6 + $0xbc] sm:$0xf]
    %v130 = vld [vmem:[#allocation6 + $0xc0] sm:$0xff]
    %v131 = vld [vmem:[#allocation6 + $0xc8] sm:$0xf]
    %v132 = vld [vmem:[#allocation6 + $0xcc] sm:$0xff]
    %v133 = vld [vmem:[#allocation6 + $0xd4] sm:$0xf]
    %v134 = vld [vmem:[#allocation6 + $0xd8] sm:$0xff]
    %v135 = vld [vmem:[#allocation6 + $0xe0] sm:$0xf]
    %v136 = vld [vmem:[#allocation6 + $0xe4] sm:$0xff]
    %v137 = vld [vmem:[#allocation6 + $0xec] sm:$0xf]
    %v138 = vld [vmem:[#allocation6 + $0xf0] sm:$0xff]
    %v139 = vld [vmem:[#allocation6 + $0xf8] sm:$0xf]
    %v140 = vld [vmem:[#allocation6 + $0xfc] sm:$0xff]
    %v141 = vld [vmem:[#allocation6 + $0x104] sm:$0xf]
    %v142 = vld [vmem:[#allocation6 + $0x108] sm:$0xff]
    %v143 = vld [vmem:[#allocation6 + $0x110] sm:$0xf]
    %v144 = vld [vmem:[#allocation6 + $0x114] sm:$0xff]
    %v145 = vld [vmem:[#allocation6 + $0x11c] sm:$0xf]
    %v146 = vld [vmem:[#allocation6 + $0x120] sm:$0xff]
    %v147 = vld [vmem:[#allocation6 + $0x128] sm:$0xf]
    %v148 = vld [vmem:[#allocation6 + $0x12c] sm:$0xff]
    %v149 = vld [vmem:[#allocation6 + $0x134] sm:$0xf]
    %v150 = vld [vmem:[#allocation6 + $0x138] sm:$0xff]
    %v151 = vld [vmem:[#allocation6 + $0x140] sm:$0xf]
    %v152 = vld [vmem:[#allocation6 + $0x144] sm:$0xff]
    %v153 = vld [vmem:[#allocation6 + $0x14c] sm:$0xf]
    %v154 = vld [vmem:[#allocation6 + $0x150] sm:$0xff]
    %v155 = vld [vmem:[#allocation6 + $0x158] sm:$0xf]
    %v156 = vld [vmem:[#allocation6 + $0x15c] sm:$0xff]
    %v157 = vld [vmem:[#allocation6 + $0x164] sm:$0xf]
    %v158 = vld [vmem:[#allocation6 + $0x168] sm:$0xff]
    %v159 = vld [vmem:[#allocation6 + $0x170] sm:$0xf]
    %v160 = vld [vmem:[#allocation6 + $0x174] sm:$0xff]
    %v161 = vld [vmem:[#allocation6 + $0x17c] sm:$0xf]
    %v162 = vld [vmem:[#allocation6 + $0x180] sm:$0xff]
    %v163 = vld [vmem:[#allocation6 + $0x188] sm:$0xf]
    %v164 = vld [vmem:[#allocation6 + $0x18c] sm:$0xff]
    %v165 = vld [vmem:[#allocation6 + $0x194] sm:$0xf]
    %v166 = vld [vmem:[#allocation6 + $0x198] sm:$0xff]
    %v167 = vld [vmem:[#allocation6 + $0x1a0] sm:$0xf]
    %v168 = vld [vmem:[#allocation6 + $0x1a4] sm:$0xff]
    %v169 = vld [vmem:[#allocation6 + $0x1ac] sm:$0xf]
    %v170 = vld [vmem:[#allocation6 + $0x1b0] sm:$0xff]
    %v171 = vld [vmem:[#allocation6 + $0x1b8] sm:$0xf]
    %v172 = vld [vmem:[#allocation6 + $0x1bc] sm:$0xff]
    %v173 = vld [vmem:[#allocation6 + $0x1c4] sm:$0xf]
    %v174 = vld [vmem:[#allocation6 + $0x1c8] sm:$0xff]
    %v175 = vld [vmem:[#allocation6 + $0x1d0] sm:$0xf]
    %v176 = vld [vmem:[#allocation6 + $0x1d4] sm:$0xff]
    %v177 = vld [vmem:[#allocation6 + $0x1dc] sm:$0xf]
    %v178 = vld [vmem:[#allocation6 + $0x1e0] sm:$0xff]
    %v179 = vld [vmem:[#allocation6 + $0x1e8] sm:$0xf]
    %v180 = vld [vmem:[#allocation6 + $0x1ec] sm:$0xff]
    %v181 = vld [vmem:[#allocation6 + $0x1f4] sm:$0xf]
    %v182 = vld [vmem:[#allocation6 + $0x1f8] sm:$0xff]
    %v183 = vld [vmem:[#allocation6 + $0x200] sm:$0xf]
    %v184 = vld [vmem:[#allocation6 + $0x204] sm:$0xff]
    %v185 = vld [vmem:[#allocation6 + $0x20c] sm:$0xf]
    %v186 = vld [vmem:[#allocation6 + $0x210] sm:$0xff]
    %v187 = vld [vmem:[#allocation6 + $0x218] sm:$0xf]
    %v188 = vld [vmem:[#allocation6 + $0x21c] sm:$0xff]
    %v189 = vld [vmem:[#allocation6 + $0x224] sm:$0xf]
    %v190 = vld [vmem:[#allocation6 + $0x228] sm:$0xff]
    %v191 = vld [vmem:[#allocation6 + $0x230] sm:$0xf]
    %v192 = vld [vmem:[#allocation6 + $0x234] sm:$0xff]
    %v193 = vld [vmem:[#allocation6 + $0x23c] sm:$0xf]
    %v194 = vld [vmem:[#allocation6 + $0x240] sm:$0xff]
    %v195 = vld [vmem:[#allocation6 + $0x248] sm:$0xf]
    %v196 = vld [vmem:[#allocation6 + $0x24c] sm:$0xff]
    %v197 = vld [vmem:[#allocation6 + $0x254] sm:$0xf]
    %v198 = vld [vmem:[#allocation6 + $0x258] sm:$0xff]
    %v199 = vld [vmem:[#allocation6 + $0x260] sm:$0xf]
    %v200 = vld [vmem:[#allocation6 + $0x264] sm:$0xff]
    %v201 = vld [vmem:[#allocation6 + $0x26c] sm:$0xf]
    %v202 = vld [vmem:[#allocation6 + $0x270] sm:$0xff]
    %v203 = vld [vmem:[#allocation6 + $0x278] sm:$0xf]
    %v204 = vld [vmem:[#allocation6 + $0x27c] sm:$0xff]
    %v205 = vld [vmem:[#allocation6 + $0x284] sm:$0xf]
    %v206 = vld [vmem:[#allocation6 + $0x288] sm:$0xff]
    %v207 = vld [vmem:[#allocation6 + $0x290] sm:$0xf]
    %v208 = vld [vmem:[#allocation6 + $0x294] sm:$0xff]
    %v209 = vld [vmem:[#allocation6 + $0x29c] sm:$0xf]
    %v210 = vld [vmem:[#allocation6 + $0x2a0] sm:$0xff]
    %v211 = vld [vmem:[#allocation6 + $0x2a8] sm:$0xf]
    %v212 = vld [vmem:[#allocation6 + $0x2ac] sm:$0xff]
    %v213 = vld [vmem:[#allocation6 + $0x2b4] sm:$0xf]
    %v214 = vld [vmem:[#allocation6 + $0x2b8] sm:$0xff]
    %v215 = vld [vmem:[#allocation6 + $0x2c0] sm:$0xf]
    %v216 = vld [vmem:[#allocation6 + $0x2c4] sm:$0xff]
    %v217 = vld [vmem:[#allocation6 + $0x2cc] sm:$0xf]
    %v218 = vld [vmem:[#allocation6 + $0x2d0] sm:$0xff]
    %v219 = vld [vmem:[#allocation6 + $0x2d8] sm:$0xf]
    %v220 = vld [vmem:[#allocation6 + $0x2dc] sm:$0xff]
    %v221 = vld [vmem:[#allocation6 + $0x2e4] sm:$0xf]
    %v222 = vld [vmem:[#allocation6 + $0x2e8] sm:$0xff]
    %v223 = vld [vmem:[#allocation6 + $0x2f0] sm:$0xf]
    %v224 = vld [vmem:[#allocation6 + $0x2f4] sm:$0xff]
    %v225 = vld [vmem:[#allocation6 + $0x2fc] sm:$0xf]
    %v226 = vld [vmem:[#allocation6 + $0x300] sm:$0xff]
    %v227 = vld [vmem:[#allocation6 + $0x308] sm:$0xf]
    %v228 = vld [vmem:[#allocation6 + $0x30c] sm:$0xff]
    %v229 = vld [vmem:[#allocation6 + $0x314] sm:$0xf]
    %v230 = vld [vmem:[#allocation6 + $0x318] sm:$0xff]
    %v231 = vld [vmem:[#allocation6 + $0x320] sm:$0xf]
    %v232 = vld [vmem:[#allocation6 + $0x324] sm:$0xff]
    %v233 = vld [vmem:[#allocation6 + $0x32c] sm:$0xf]
    %v234 = vld [vmem:[#allocation6 + $0x330] sm:$0xff]
    %v235 = vld [vmem:[#allocation6 + $0x338] sm:$0xf]
    %v236 = vld [vmem:[#allocation6 + $0x33c] sm:$0xff]
    %v237 = vld [vmem:[#allocation6 + $0x344] sm:$0xf]
    %v238 = vld [vmem:[#allocation6 + $0x348] sm:$0xff]
    %v239 = vld [vmem:[#allocation6 + $0x350] sm:$0xf]
    %v240 = vld [vmem:[#allocation6 + $0x354] sm:$0xff]
    %v241 = vld [vmem:[#allocation6 + $0x35c] sm:$0xf]
    %v242 = vld [vmem:[#allocation6 + $0x360] sm:$0xff]
    %v243 = vld [vmem:[#allocation6 + $0x368] sm:$0xf]
    %v244 = vld [vmem:[#allocation6 + $0x36c] sm:$0xff]
    %v245 = vld [vmem:[#allocation6 + $0x374] sm:$0xf]
    %v246 = vld [vmem:[#allocation6 + $0x378] sm:$0xff]
    %v247 = vld [vmem:[#allocation6 + $0x380] sm:$0xf]
    %v248 = vld [vmem:[#allocation6 + $0x384] sm:$0xff]
    %v249 = vld [vmem:[#allocation6 + $0x38c] sm:$0xf]
    %v250 = vld [vmem:[#allocation6 + $0x390] sm:$0xff]
    %v251 = vld [vmem:[#allocation6 + $0x398] sm:$0xf]
    %v252 = vld [vmem:[#allocation6 + $0x39c] sm:$0xff]
    %v253 = vld [vmem:[#allocation6 + $0x3a4] sm:$0xf]
    %v254 = vld [vmem:[#allocation6 + $0x3a8] sm:$0xff]
    %v255 = vld [vmem:[#allocation6 + $0x3b0] sm:$0xf]
    %v256 = vld [vmem:[#allocation6 + $0x3b4] sm:$0xff]
    %v257 = vld [vmem:[#allocation6 + $0x3bc] sm:$0xf]
    %v258 = vld [vmem:[#allocation6 + $0x3c0] sm:$0xff]
    %v259 = vld [vmem:[#allocation6 + $0x3c8] sm:$0xf]
    %v260 = vld [vmem:[#allocation6 + $0x3cc] sm:$0xff]
    %v261 = vld [vmem:[#allocation6 + $0x3d4] sm:$0xf]
    %v262 = vld [vmem:[#allocation6 + $0x3d8] sm:$0xff]
    %v263 = vld [vmem:[#allocation6 + $0x3e0] sm:$0xf]
    %v264 = vld [vmem:[#allocation6 + $0x3e4] sm:$0xff]
    %v265 = vld [vmem:[#allocation6 + $0x3ec] sm:$0xf]
    %v266 = vld [vmem:[#allocation6 + $0x3f0] sm:$0xff]
    %v267 = vld [vmem:[#allocation6 + $0x3f8] sm:$0xf]
    %v268 = vld [vmem:[#allocation6 + $0x3fc] sm:$0xff]
    %v269 = vld [vmem:[#allocation6 + $0x404] sm:$0xf]
    %v270 = vld [vmem:[#allocation6 + $0x408] sm:$0xff]
    %v271 = vld [vmem:[#allocation6 + $0x410] sm:$0xf]
    %v272 = vld [vmem:[#allocation6 + $0x414] sm:$0xff]
    %v273 = vld [vmem:[#allocation6 + $0x41c] sm:$0xf]
    %v274 = vld [vmem:[#allocation6 + $0x420] sm:$0xff]
    %v275 = vld [vmem:[#allocation6 + $0x428] sm:$0xf]
    %v276 = vld [vmem:[#allocation6 + $0x42c] sm:$0xff]
    %v277 = vld [vmem:[#allocation6 + $0x434] sm:$0xf]
    %v278 = vld [vmem:[#allocation6 + $0x438] sm:$0xff]
    %v279 = vld [vmem:[#allocation6 + $0x440] sm:$0xf]
    %v280 = vld [vmem:[#allocation6 + $0x444] sm:$0xff]
    %v281 = vld [vmem:[#allocation6 + $0x44c] sm:$0xf]
    %v282 = vld [vmem:[#allocation6 + $0x450] sm:$0xff]
    %v283 = vld [vmem:[#allocation6 + $0x458] sm:$0xf]
    %v284 = vld [vmem:[#allocation6 + $0x45c] sm:$0xff]
    %v285 = vld [vmem:[#allocation6 + $0x464] sm:$0xf]
    %v286 = vld [vmem:[#allocation6 + $0x468] sm:$0xff]
    %v287 = vld [vmem:[#allocation6 + $0x470] sm:$0xf]
    %v288 = vld [vmem:[#allocation6 + $0x474] sm:$0xff]
    %v289 = vld [vmem:[#allocation6 + $0x47c] sm:$0xf]
    %v290 = vld [vmem:[#allocation6 + $0x480] sm:$0xff]
    %v291 = vld [vmem:[#allocation6 + $0x488] sm:$0xf]
    %v292 = vld [vmem:[#allocation6 + $0x48c] sm:$0xff]
    %v293 = vld [vmem:[#allocation6 + $0x494] sm:$0xf]
    %v294 = vld [vmem:[#allocation6 + $0x498] sm:$0xff]
    %v295 = vld [vmem:[#allocation6 + $0x4a0] sm:$0xf]
    %v296 = vld [vmem:[#allocation6 + $0x4a4] sm:$0xff]
    %v297 = vld [vmem:[#allocation6 + $0x4ac] sm:$0xf]
    %v298 = vld [vmem:[#allocation6 + $0x4b0] sm:$0xff]
    %v299 = vld [vmem:[#allocation6 + $0x4b8] sm:$0xf]
    %v300 = vld [vmem:[#allocation6 + $0x4bc] sm:$0xff]
    %v301 = vld [vmem:[#allocation6 + $0x4c4] sm:$0xf]
    %v302 = vld [vmem:[#allocation6 + $0x4c8] sm:$0xff]
    %v303 = vld [vmem:[#allocation6 + $0x4d0] sm:$0xf]
    %v304 = vld [vmem:[#allocation6 + $0x4d4] sm:$0xff]
    %v305 = vld [vmem:[#allocation6 + $0x4dc] sm:$0xf]
    %v306 = vld [vmem:[#allocation6 + $0x4e0] sm:$0xff]
    %v307 = vld [vmem:[#allocation6 + $0x4e8] sm:$0xf]
    %v308 = vld [vmem:[#allocation6 + $0x4ec] sm:$0xff]
    %v309 = vld [vmem:[#allocation6 + $0x4f4] sm:$0xf]
    %v310 = vld [vmem:[#allocation6 + $0x4f8] sm:$0xff]
    %v311 = vld [vmem:[#allocation6 + $0x500] sm:$0xf]
    %v312 = vld [vmem:[#allocation6 + $0x504] sm:$0xff]
    %v313 = vld [vmem:[#allocation6 + $0x50c] sm:$0xf]
    %v314 = vld [vmem:[#allocation6 + $0x510] sm:$0xff]
    %v315 = vld [vmem:[#allocation6 + $0x518] sm:$0xf]
    %v316 = vld [vmem:[#allocation6 + $0x51c] sm:$0xff]
    %v317 = vld [vmem:[#allocation6 + $0x524] sm:$0xf]
    %v318 = vld [vmem:[#allocation6 + $0x528] sm:$0xff]
    %v319 = vld [vmem:[#allocation6 + $0x530] sm:$0xf]
    %v320 = vld [vmem:[#allocation6 + $0x534] sm:$0xff]
    %v321 = vld [vmem:[#allocation6 + $0x53c] sm:$0xf]
    %v322 = vld [vmem:[#allocation6 + $0x540] sm:$0xff]
    %v323 = vld [vmem:[#allocation6 + $0x548] sm:$0xf]
    %v324 = vld [vmem:[#allocation6 + $0x54c] sm:$0xff]
    %v325 = vld [vmem:[#allocation6 + $0x554] sm:$0xf]
    %v326 = vld [vmem:[#allocation6 + $0x558] sm:$0xff]
    %v327 = vld [vmem:[#allocation6 + $0x560] sm:$0xf]
    %v328 = vld [vmem:[#allocation6 + $0x564] sm:$0xff]
    %v329 = vld [vmem:[#allocation6 + $0x56c] sm:$0xf]
    %v330 = vld [vmem:[#allocation6 + $0x570] sm:$0xff]
    %v331 = vld [vmem:[#allocation6 + $0x578] sm:$0xf]
    %v332 = vld [vmem:[#allocation6 + $0x57c] sm:$0xff]
    %v333 = vld [vmem:[#allocation6 + $0x584] sm:$0xf]
    %v334 = vld [vmem:[#allocation6 + $0x588] sm:$0xff]
    %v335 = vld [vmem:[#allocation6 + $0x590] sm:$0xf]
    %v336 = vld [vmem:[#allocation6 + $0x594] sm:$0xff]
    %v337 = vld [vmem:[#allocation6 + $0x59c] sm:$0xf]
    %v338 = vld [vmem:[#allocation6 + $0x5a0] sm:$0xff]
    %v339 = vld [vmem:[#allocation6 + $0x5a8] sm:$0xf]
    %v340 = vld [vmem:[#allocation6 + $0x5ac] sm:$0xff]
    %v341 = vld [vmem:[#allocation6 + $0x5b4] sm:$0xf]
    %v342 = vld [vmem:[#allocation6 + $0x5b8] sm:$0xff]
    %v343 = vld [vmem:[#allocation6 + $0x5c0] sm:$0xf]
    %v344 = vld [vmem:[#allocation6 + $0x5c4] sm:$0xff]
    %v345 = vld [vmem:[#allocation6 + $0x5cc] sm:$0xf]
    %v346 = vld [vmem:[#allocation6 + $0x5d0] sm:$0xff]
    %v347 = vld [vmem:[#allocation6 + $0x5d8] sm:$0xf]
    %v348 = vld [vmem:[#allocation6 + $0x5dc] sm:$0xff]
    %v349 = vld [vmem:[#allocation6 + $0x5e4] sm:$0xf]
    %v350 = vld [vmem:[#allocation6 + $0x5e8] sm:$0xff]
    %v351 = vld [vmem:[#allocation6 + $0x5f0] sm:$0xf]
    %v352 = vld [vmem:[#allocation6 + $0x5f4] sm:$0xff]
    %v353 = vld [vmem:[#allocation6 + $0x5fc] sm:$0xf]
    %v362 = vunpack.c.l.b16 %v90
    %v363 = vunpack.c.h.b16 %v90
    %v364 = vunpack.c.l.b16 %v91
    %v365 = vunpack.c.h.b16 %v91
    %v366 = vunpack.c.l.b16 %v92
    %v367 = vunpack.c.h.b16 %v92
    %v368 = vunpack.c.l.b16 %v93
    %v369 = vunpack.c.h.b16 %v93
    %v370 = vunpack.c.l.b16 %v94
    %v371 = vunpack.c.h.b16 %v94
    %v372 = vunpack.c.l.b16 %v95
    %v373 = vunpack.c.h.b16 %v95
    %v374 = vunpack.c.l.b16 %v96
    %v375 = vunpack.c.h.b16 %v96
    %v376 = vunpack.c.l.b16 %v97
    %v377 = vunpack.c.h.b16 %v97
    %v378 = vpack.c.b16 %v370, %v362
    %v379 = vpack.c.b16 %v371, %v363
    %v380 = vpack.c.b16 %v372, %v364
    %v381 = vpack.c.b16 %v373, %v365
    %v382 = vpack.c.b16 %v374, %v366
    %v383 = vpack.c.b16 %v375, %v367
    %v384 = vpack.c.b16 %v376, %v368
    %v385 = vpack.c.b16 %v377, %v369
    %v650 = vunpack.c.l.b16 %v98
    %v651 = vunpack.c.h.b16 %v98
    %v652 = vunpack.c.l.b16 %v99
    %v653 = vunpack.c.l.b16 %v100
    %v654 = vunpack.c.h.b16 %v100
    %v655 = vunpack.c.l.b16 %v101
    %v656 = vunpack.c.l.b16 %v102
    %v657 = vunpack.c.h.b16 %v102
    %v658 = vunpack.c.l.b16 %v103
    %v659 = vunpack.c.l.b16 %v104
    %v660 = vunpack.c.h.b16 %v104
    %v661 = vunpack.c.l.b16 %v105
    %v662 = vunpack.c.l.b16 %v106
    %v663 = vunpack.c.h.b16 %v106
    %v664 = vunpack.c.l.b16 %v107
    %v665 = vunpack.c.l.b16 %v108
    %v666 = vunpack.c.h.b16 %v108
    %v667 = vunpack.c.l.b16 %v109
    %v668 = vunpack.c.l.b16 %v110
    %v669 = vunpack.c.h.b16 %v110
    %v670 = vunpack.c.l.b16 %v111
    %v671 = vunpack.c.l.b16 %v112
    %v672 = vunpack.c.h.b16 %v112
    %v673 = vunpack.c.l.b16 %v113
    %v674 = vunpack.c.l.b16 %v114
    %v675 = vunpack.c.h.b16 %v114
    %v676 = vunpack.c.l.b16 %v115
    %v677 = vunpack.c.l.b16 %v116
    %v678 = vunpack.c.h.b16 %v116
    %v679 = vunpack.c.l.b16 %v117
    %v680 = vunpack.c.l.b16 %v118
    %v681 = vunpack.c.h.b16 %v118
    %v682 = vunpack.c.l.b16 %v119
    %v683 = vunpack.c.l.b16 %v120
    %v684 = vunpack.c.h.b16 %v120
    %v685 = vunpack.c.l.b16 %v121
    %v686 = vunpack.c.l.b16 %v122
    %v687 = vunpack.c.h.b16 %v122
    %v688 = vunpack.c.l.b16 %v123
    %v689 = vunpack.c.l.b16 %v124
    %v690 = vunpack.c.h.b16 %v124
    %v691 = vunpack.c.l.b16 %v125
    %v692 = vunpack.c.l.b16 %v126
    %v693 = vunpack.c.h.b16 %v126
    %v694 = vunpack.c.l.b16 %v127
    %v695 = vunpack.c.l.b16 %v128
    %v696 = vunpack.c.h.b16 %v128
    %v697 = vunpack.c.l.b16 %v129
    %v698 = vunpack.c.l.b16 %v130
    %v699 = vunpack.c.h.b16 %v130
    %v700 = vunpack.c.l.b16 %v131
    %v701 = vunpack.c.l.b16 %v132
    %v702 = vunpack.c.h.b16 %v132
    %v703 = vunpack.c.l.b16 %v133
    %v704 = vunpack.c.l.b16 %v134
    %v705 = vunpack.c.h.b16 %v134
    %v706 = vunpack.c.l.b16 %v135
    %v707 = vunpack.c.l.b16 %v136
    %v708 = vunpack.c.h.b16 %v136
    %v709 = vunpack.c.l.b16 %v137
    %v710 = vunpack.c.l.b16 %v138
    %v711 = vunpack.c.h.b16 %v138
    %v712 = vunpack.c.l.b16 %v139
    %v713 = vunpack.c.l.b16 %v140
    %v714 = vunpack.c.h.b16 %v140
    %v715 = vunpack.c.l.b16 %v141
    %v716 = vunpack.c.l.b16 %v142
    %v717 = vunpack.c.h.b16 %v142
    %v718 = vunpack.c.l.b16 %v143
    %v719 = vunpack.c.l.b16 %v144
    %v720 = vunpack.c.h.b16 %v144
    %v721 = vunpack.c.l.b16 %v145
    %v722 = vunpack.c.l.b16 %v146
    %v723 = vunpack.c.h.b16 %v146
    %v724 = vunpack.c.l.b16 %v147
    %v725 = vunpack.c.l.b16 %v148
    %v726 = vunpack.c.h.b16 %v148
    %v727 = vunpack.c.l.b16 %v149
    %v728 = vunpack.c.l.b16 %v150
    %v729 = vunpack.c.h.b16 %v150
    %v730 = vunpack.c.l.b16 %v151
    %v731 = vunpack.c.l.b16 %v152
    %v732 = vunpack.c.h.b16 %v152
    %v733 = vunpack.c.l.b16 %v153
    %v734 = vunpack.c.l.b16 %v154
    %v735 = vunpack.c.h.b16 %v154
    %v736 = vunpack.c.l.b16 %v155
    %v737 = vunpack.c.l.b16 %v156
    %v738 = vunpack.c.h.b16 %v156
    %v739 = vunpack.c.l.b16 %v157
    %v740 = vunpack.c.l.b16 %v158
    %v741 = vunpack.c.h.b16 %v158
    %v742 = vunpack.c.l.b16 %v159
    %v743 = vunpack.c.l.b16 %v160
    %v744 = vunpack.c.h.b16 %v160
    %v745 = vunpack.c.l.b16 %v161
    %v746 = vunpack.c.l.b16 %v162
    %v747 = vunpack.c.h.b16 %v162
    %v748 = vunpack.c.l.b16 %v163
    %v749 = vunpack.c.l.b16 %v164
    %v750 = vunpack.c.h.b16 %v164
    %v751 = vunpack.c.l.b16 %v165
    %v752 = vunpack.c.l.b16 %v166
    %v753 = vunpack.c.h.b16 %v166
    %v754 = vunpack.c.l.b16 %v167
    %v755 = vunpack.c.l.b16 %v168
    %v756 = vunpack.c.h.b16 %v168
    %v757 = vunpack.c.l.b16 %v169
    %v758 = vunpack.c.l.b16 %v170
    %v759 = vunpack.c.h.b16 %v170
    %v760 = vunpack.c.l.b16 %v171
    %v761 = vunpack.c.l.b16 %v172
    %v762 = vunpack.c.h.b16 %v172
    %v763 = vunpack.c.l.b16 %v173
    %v764 = vunpack.c.l.b16 %v174
    %v765 = vunpack.c.h.b16 %v174
    %v766 = vunpack.c.l.b16 %v175
    %v767 = vunpack.c.l.b16 %v176
    %v768 = vunpack.c.h.b16 %v176
    %v769 = vunpack.c.l.b16 %v177
    %v770 = vunpack.c.l.b16 %v178
    %v771 = vunpack.c.h.b16 %v178
    %v772 = vunpack.c.l.b16 %v179
    %v773 = vunpack.c.l.b16 %v180
    %v774 = vunpack.c.h.b16 %v180
    %v775 = vunpack.c.l.b16 %v181
    %v776 = vunpack.c.l.b16 %v182
    %v777 = vunpack.c.h.b16 %v182
    %v778 = vunpack.c.l.b16 %v183
    %v779 = vunpack.c.l.b16 %v184
    %v780 = vunpack.c.h.b16 %v184
    %v781 = vunpack.c.l.b16 %v185
    %v782 = vunpack.c.l.b16 %v186
    %v783 = vunpack.c.h.b16 %v186
    %v784 = vunpack.c.l.b16 %v187
    %v785 = vunpack.c.l.b16 %v188
    %v786 = vunpack.c.h.b16 %v188
    %v787 = vunpack.c.l.b16 %v189
    %v788 = vunpack.c.l.b16 %v190
    %v789 = vunpack.c.h.b16 %v190
    %v790 = vunpack.c.l.b16 %v191
    %v791 = vunpack.c.l.b16 %v192
    %v792 = vunpack.c.h.b16 %v192
    %v793 = vunpack.c.l.b16 %v193
    %v794 = vunpack.c.l.b16 %v194
    %v795 = vunpack.c.h.b16 %v194
    %v796 = vunpack.c.l.b16 %v195
    %v797 = vunpack.c.l.b16 %v196
    %v798 = vunpack.c.h.b16 %v196
    %v799 = vunpack.c.l.b16 %v197
    %v800 = vunpack.c.l.b16 %v198
    %v801 = vunpack.c.h.b16 %v198
    %v802 = vunpack.c.l.b16 %v199
    %v803 = vunpack.c.l.b16 %v200
    %v804 = vunpack.c.h.b16 %v200
    %v805 = vunpack.c.l.b16 %v201
    %v806 = vunpack.c.l.b16 %v202
    %v807 = vunpack.c.h.b16 %v202
    %v808 = vunpack.c.l.b16 %v203
    %v809 = vunpack.c.l.b16 %v204
    %v810 = vunpack.c.h.b16 %v204
    %v811 = vunpack.c.l.b16 %v205
    %v812 = vunpack.c.l.b16 %v206
    %v813 = vunpack.c.h.b16 %v206
    %v814 = vunpack.c.l.b16 %v207
    %v815 = vunpack.c.l.b16 %v208
    %v816 = vunpack.c.h.b16 %v208
    %v817 = vunpack.c.l.b16 %v209
    %v818 = vunpack.c.l.b16 %v210
    %v819 = vunpack.c.h.b16 %v210
    %v820 = vunpack.c.l.b16 %v211
    %v821 = vunpack.c.l.b16 %v212
    %v822 = vunpack.c.h.b16 %v212
    %v823 = vunpack.c.l.b16 %v213
    %v824 = vunpack.c.l.b16 %v214
    %v825 = vunpack.c.h.b16 %v214
    %v826 = vunpack.c.l.b16 %v215
    %v827 = vunpack.c.l.b16 %v216
    %v828 = vunpack.c.h.b16 %v216
    %v829 = vunpack.c.l.b16 %v217
    %v830 = vunpack.c.l.b16 %v218
    %v831 = vunpack.c.h.b16 %v218
    %v832 = vunpack.c.l.b16 %v219
    %v833 = vunpack.c.l.b16 %v220
    %v834 = vunpack.c.h.b16 %v220
    %v835 = vunpack.c.l.b16 %v221
    %v836 = vunpack.c.l.b16 %v222
    %v837 = vunpack.c.h.b16 %v222
    %v838 = vunpack.c.l.b16 %v223
    %v839 = vunpack.c.l.b16 %v224
    %v840 = vunpack.c.h.b16 %v224
    %v841 = vunpack.c.l.b16 %v225
    %v842 = vunpack.c.l.b16 %v226
    %v843 = vunpack.c.h.b16 %v226
    %v844 = vunpack.c.l.b16 %v227
    %v845 = vunpack.c.l.b16 %v228
    %v846 = vunpack.c.h.b16 %v228
    %v847 = vunpack.c.l.b16 %v229
    %v848 = vunpack.c.l.b16 %v230
    %v849 = vunpack.c.h.b16 %v230
    %v850 = vunpack.c.l.b16 %v231
    %v851 = vunpack.c.l.b16 %v232
    %v852 = vunpack.c.h.b16 %v232
    %v853 = vunpack.c.l.b16 %v233
    %v854 = vunpack.c.l.b16 %v234
    %v855 = vunpack.c.h.b16 %v234
    %v856 = vunpack.c.l.b16 %v235
    %v857 = vunpack.c.l.b16 %v236
    %v858 = vunpack.c.h.b16 %v236
    %v859 = vunpack.c.l.b16 %v237
    %v860 = vunpack.c.l.b16 %v238
    %v861 = vunpack.c.h.b16 %v238
    %v862 = vunpack.c.l.b16 %v239
    %v863 = vunpack.c.l.b16 %v240
    %v864 = vunpack.c.h.b16 %v240
    %v865 = vunpack.c.l.b16 %v241
    %v866 = vunpack.c.l.b16 %v242
    %v867 = vunpack.c.h.b16 %v242
    %v868 = vunpack.c.l.b16 %v243
    %v869 = vunpack.c.l.b16 %v244
    %v870 = vunpack.c.h.b16 %v244
    %v871 = vunpack.c.l.b16 %v245
    %v872 = vunpack.c.l.b16 %v246
    %v873 = vunpack.c.h.b16 %v246
    %v874 = vunpack.c.l.b16 %v247
    %v875 = vunpack.c.l.b16 %v248
    %v876 = vunpack.c.h.b16 %v248
    %v877 = vunpack.c.l.b16 %v249
    %v878 = vunpack.c.l.b16 %v250
    %v879 = vunpack.c.h.b16 %v250
    %v880 = vunpack.c.l.b16 %v251
    %v881 = vunpack.c.l.b16 %v252
    %v882 = vunpack.c.h.b16 %v252
    %v883 = vunpack.c.l.b16 %v253
    %v884 = vunpack.c.l.b16 %v254
    %v885 = vunpack.c.h.b16 %v254
    %v886 = vunpack.c.l.b16 %v255
    %v887 = vunpack.c.l.b16 %v256
    %v888 = vunpack.c.h.b16 %v256
    %v889 = vunpack.c.l.b16 %v257
    %v890 = vunpack.c.l.b16 %v258
    %v891 = vunpack.c.h.b16 %v258
    %v892 = vunpack.c.l.b16 %v259
    %v893 = vunpack.c.l.b16 %v260
    %v894 = vunpack.c.h.b16 %v260
    %v895 = vunpack.c.l.b16 %v261
    %v896 = vunpack.c.l.b16 %v262
    %v897 = vunpack.c.h.b16 %v262
    %v898 = vunpack.c.l.b16 %v263
    %v899 = vunpack.c.l.b16 %v264
    %v900 = vunpack.c.h.b16 %v264
    %v901 = vunpack.c.l.b16 %v265
    %v902 = vunpack.c.l.b16 %v266
    %v903 = vunpack.c.h.b16 %v266
    %v904 = vunpack.c.l.b16 %v267
    %v905 = vunpack.c.l.b16 %v268
    %v906 = vunpack.c.h.b16 %v268
    %v907 = vunpack.c.l.b16 %v269
    %v908 = vunpack.c.l.b16 %v270
    %v909 = vunpack.c.h.b16 %v270
    %v910 = vunpack.c.l.b16 %v271
    %v911 = vunpack.c.l.b16 %v272
    %v912 = vunpack.c.h.b16 %v272
    %v913 = vunpack.c.l.b16 %v273
    %v914 = vunpack.c.l.b16 %v274
    %v915 = vunpack.c.h.b16 %v274
    %v916 = vunpack.c.l.b16 %v275
    %v917 = vunpack.c.l.b16 %v276
    %v918 = vunpack.c.h.b16 %v276
    %v919 = vunpack.c.l.b16 %v277
    %v920 = vunpack.c.l.b16 %v278
    %v921 = vunpack.c.h.b16 %v278
    %v922 = vunpack.c.l.b16 %v279
    %v923 = vunpack.c.l.b16 %v280
    %v924 = vunpack.c.h.b16 %v280
    %v925 = vunpack.c.l.b16 %v281
    %v926 = vunpack.c.l.b16 %v282
    %v927 = vunpack.c.h.b16 %v282
    %v928 = vunpack.c.l.b16 %v283
    %v929 = vunpack.c.l.b16 %v284
    %v930 = vunpack.c.h.b16 %v284
    %v931 = vunpack.c.l.b16 %v285
    %v932 = vunpack.c.l.b16 %v286
    %v933 = vunpack.c.h.b16 %v286
    %v934 = vunpack.c.l.b16 %v287
    %v935 = vunpack.c.l.b16 %v288
    %v936 = vunpack.c.h.b16 %v288
    %v937 = vunpack.c.l.b16 %v289
    %v938 = vunpack.c.l.b16 %v290
    %v939 = vunpack.c.h.b16 %v290
    %v940 = vunpack.c.l.b16 %v291
    %v941 = vunpack.c.l.b16 %v292
    %v942 = vunpack.c.h.b16 %v292
    %v943 = vunpack.c.l.b16 %v293
    %v944 = vunpack.c.l.b16 %v294
    %v945 = vunpack.c.h.b16 %v294
    %v946 = vunpack.c.l.b16 %v295
    %v947 = vunpack.c.l.b16 %v296
    %v948 = vunpack.c.h.b16 %v296
    %v949 = vunpack.c.l.b16 %v297
    %v950 = vunpack.c.l.b16 %v298
    %v951 = vunpack.c.h.b16 %v298
    %v952 = vunpack.c.l.b16 %v299
    %v953 = vunpack.c.l.b16 %v300
    %v954 = vunpack.c.h.b16 %v300
    %v955 = vunpack.c.l.b16 %v301
    %v956 = vunpack.c.l.b16 %v302
    %v957 = vunpack.c.h.b16 %v302
    %v958 = vunpack.c.l.b16 %v303
    %v959 = vunpack.c.l.b16 %v304
    %v960 = vunpack.c.h.b16 %v304
    %v961 = vunpack.c.l.b16 %v305
    %v962 = vunpack.c.l.b16 %v306
    %v963 = vunpack.c.h.b16 %v306
    %v964 = vunpack.c.l.b16 %v307
    %v965 = vunpack.c.l.b16 %v308
    %v966 = vunpack.c.h.b16 %v308
    %v967 = vunpack.c.l.b16 %v309
    %v968 = vunpack.c.l.b16 %v310
    %v969 = vunpack.c.h.b16 %v310
    %v970 = vunpack.c.l.b16 %v311
    %v971 = vunpack.c.l.b16 %v312
    %v972 = vunpack.c.h.b16 %v312
    %v973 = vunpack.c.l.b16 %v313
    %v974 = vunpack.c.l.b16 %v314
    %v975 = vunpack.c.h.b16 %v314
    %v976 = vunpack.c.l.b16 %v315
    %v977 = vunpack.c.l.b16 %v316
    %v978 = vunpack.c.h.b16 %v316
    %v979 = vunpack.c.l.b16 %v317
    %v980 = vunpack.c.l.b16 %v318
    %v981 = vunpack.c.h.b16 %v318
    %v982 = vunpack.c.l.b16 %v319
    %v983 = vunpack.c.l.b16 %v320
    %v984 = vunpack.c.h.b16 %v320
    %v985 = vunpack.c.l.b16 %v321
    %v986 = vunpack.c.l.b16 %v322
    %v987 = vunpack.c.h.b16 %v322
    %v988 = vunpack.c.l.b16 %v323
    %v989 = vunpack.c.l.b16 %v324
    %v990 = vunpack.c.h.b16 %v324
    %v991 = vunpack.c.l.b16 %v325
    %v992 = vunpack.c.l.b16 %v326
    %v993 = vunpack.c.h.b16 %v326
    %v994 = vunpack.c.l.b16 %v327
    %v995 = vunpack.c.l.b16 %v328
    %v996 = vunpack.c.h.b16 %v328
    %v997 = vunpack.c.l.b16 %v329
    %v998 = vunpack.c.l.b16 %v330
    %v999 = vunpack.c.h.b16 %v330
    %v1000 = vunpack.c.l.b16 %v331
    %v1001 = vunpack.c.l.b16 %v332
    %v1002 = vunpack.c.h.b16 %v332
    %v1003 = vunpack.c.l.b16 %v333
    %v1004 = vunpack.c.l.b16 %v334
    %v1005 = vunpack.c.h.b16 %v334
    %v1006 = vunpack.c.l.b16 %v335
    %v1007 = vunpack.c.l.b16 %v336
    %v1008 = vunpack.c.h.b16 %v336
    %v1009 = vunpack.c.l.b16 %v337
    %v1010 = vunpack.c.l.b16 %v338
    %v1011 = vunpack.c.h.b16 %v338
    %v1012 = vunpack.c.l.b16 %v339
    %v1013 = vunpack.c.l.b16 %v340
    %v1014 = vunpack.c.h.b16 %v340
    %v1015 = vunpack.c.l.b16 %v341
    %v1016 = vunpack.c.l.b16 %v342
    %v1017 = vunpack.c.h.b16 %v342
    %v1018 = vunpack.c.l.b16 %v343
    %v1019 = vunpack.c.l.b16 %v344
    %v1020 = vunpack.c.h.b16 %v344
    %v1021 = vunpack.c.l.b16 %v345
    %v1022 = vunpack.c.l.b16 %v346
    %v1023 = vunpack.c.h.b16 %v346
    %v1024 = vunpack.c.l.b16 %v347
    %v1025 = vunpack.c.l.b16 %v348
    %v1026 = vunpack.c.h.b16 %v348
    %v1027 = vunpack.c.l.b16 %v349
    %v1028 = vunpack.c.l.b16 %v350
    %v1029 = vunpack.c.h.b16 %v350
    %v1030 = vunpack.c.l.b16 %v351
    %v1031 = vunpack.c.l.b16 %v352
    %v1032 = vunpack.c.h.b16 %v352
    %v1033 = vunpack.c.l.b16 %v353
    %v1034 = vpack.c.b16 %v653, %v650
    %v1035 = vpack.c.b16 %v654, %v651
    %v1036 = vpack.c.b16 %v655, %v652
    %v1037 = vpack.c.b16 %v659, %v656
    %v1038 = vpack.c.b16 %v660, %v657
    %v1039 = vpack.c.b16 %v661, %v658
    %v1040 = vpack.c.b16 %v665, %v662
    %v1041 = vpack.c.b16 %v666, %v663
    %v1042 = vpack.c.b16 %v667, %v664
    %v1043 = vpack.c.b16 %v671, %v668
    %v1044 = vpack.c.b16 %v672, %v669
    %v1045 = vpack.c.b16 %v673, %v670
    %v1046 = vpack.c.b16 %v677, %v674
    %v1047 = vpack.c.b16 %v678, %v675
    %v1048 = vpack.c.b16 %v679, %v676
    %v1049 = vpack.c.b16 %v683, %v680
    %v1050 = vpack.c.b16 %v684, %v681
    %v1051 = vpack.c.b16 %v685, %v682
    %v1052 = vpack.c.b16 %v689, %v686
    %v1053 = vpack.c.b16 %v690, %v687
    %v1054 = vpack.c.b16 %v691, %v688
    %v1055 = vpack.c.b16 %v695, %v692
    %v1056 = vpack.c.b16 %v696, %v693
    %v1057 = vpack.c.b16 %v697, %v694
    %v1058 = vpack.c.b16 %v701, %v698
    %v1059 = vpack.c.b16 %v702, %v699
    %v1060 = vpack.c.b16 %v703, %v700
    %v1061 = vpack.c.b16 %v707, %v704
    %v1062 = vpack.c.b16 %v708, %v705
    %v1063 = vpack.c.b16 %v709, %v706
    %v1064 = vpack.c.b16 %v713, %v710
    %v1065 = vpack.c.b16 %v714, %v711
    %v1066 = vpack.c.b16 %v715, %v712
    %v1067 = vpack.c.b16 %v719, %v716
    %v1068 = vpack.c.b16 %v720, %v717
    %v1069 = vpack.c.b16 %v721, %v718
    %v1070 = vpack.c.b16 %v725, %v722
    %v1071 = vpack.c.b16 %v726, %v723
    %v1072 = vpack.c.b16 %v727, %v724
    %v1073 = vpack.c.b16 %v731, %v728
    %v1074 = vpack.c.b16 %v732, %v729
    %v1075 = vpack.c.b16 %v733, %v730
    %v1076 = vpack.c.b16 %v737, %v734
    %v1077 = vpack.c.b16 %v738, %v735
    %v1078 = vpack.c.b16 %v739, %v736
    %v1079 = vpack.c.b16 %v743, %v740
    %v1080 = vpack.c.b16 %v744, %v741
    %v1081 = vpack.c.b16 %v745, %v742
    %v1082 = vpack.c.b16 %v749, %v746
    %v1083 = vpack.c.b16 %v750, %v747
    %v1084 = vpack.c.b16 %v751, %v748
    %v1085 = vpack.c.b16 %v755, %v752
    %v1086 = vpack.c.b16 %v756, %v753
    %v1087 = vpack.c.b16 %v757, %v754
    %v1088 = vpack.c.b16 %v761, %v758
    %v1089 = vpack.c.b16 %v762, %v759
    %v1090 = vpack.c.b16 %v763, %v760
    %v1091 = vpack.c.b16 %v767, %v764
    %v1092 = vpack.c.b16 %v768, %v765
    %v1093 = vpack.c.b16 %v769, %v766
    %v1094 = vpack.c.b16 %v773, %v770
    %v1095 = vpack.c.b16 %v774, %v771
    %v1096 = vpack.c.b16 %v775, %v772
    %v1097 = vpack.c.b16 %v779, %v776
    %v1098 = vpack.c.b16 %v780, %v777
    %v1099 = vpack.c.b16 %v781, %v778
    %v1100 = vpack.c.b16 %v785, %v782
    %v1101 = vpack.c.b16 %v786, %v783
    %v1102 = vpack.c.b16 %v787, %v784
    %v1103 = vpack.c.b16 %v791, %v788
    %v1104 = vpack.c.b16 %v792, %v789
    %v1105 = vpack.c.b16 %v793, %v790
    %v1106 = vpack.c.b16 %v797, %v794
    %v1107 = vpack.c.b16 %v798, %v795
    %v1108 = vpack.c.b16 %v799, %v796
    %v1109 = vpack.c.b16 %v803, %v800
    %v1110 = vpack.c.b16 %v804, %v801
    %v1111 = vpack.c.b16 %v805, %v802
    %v1112 = vpack.c.b16 %v809, %v806
    %v1113 = vpack.c.b16 %v810, %v807
    %v1114 = vpack.c.b16 %v811, %v808
    %v1115 = vpack.c.b16 %v815, %v812
    %v1116 = vpack.c.b16 %v816, %v813
    %v1117 = vpack.c.b16 %v817, %v814
    %v1118 = vpack.c.b16 %v821, %v818
    %v1119 = vpack.c.b16 %v822, %v819
    %v1120 = vpack.c.b16 %v823, %v820
    %v1121 = vpack.c.b16 %v827, %v824
    %v1122 = vpack.c.b16 %v828, %v825
    %v1123 = vpack.c.b16 %v829, %v826
    %v1124 = vpack.c.b16 %v833, %v830
    %v1125 = vpack.c.b16 %v834, %v831
    %v1126 = vpack.c.b16 %v835, %v832
    %v1127 = vpack.c.b16 %v839, %v836
    %v1128 = vpack.c.b16 %v840, %v837
    %v1129 = vpack.c.b16 %v841, %v838
    %v1130 = vpack.c.b16 %v845, %v842
    %v1131 = vpack.c.b16 %v846, %v843
    %v1132 = vpack.c.b16 %v847, %v844
    %v1133 = vpack.c.b16 %v851, %v848
    %v1134 = vpack.c.b16 %v852, %v849
    %v1135 = vpack.c.b16 %v853, %v850
    %v1136 = vpack.c.b16 %v857, %v854
    %v1137 = vpack.c.b16 %v858, %v855
    %v1138 = vpack.c.b16 %v859, %v856
    %v1139 = vpack.c.b16 %v863, %v860
    %v1140 = vpack.c.b16 %v864, %v861
    %v1141 = vpack.c.b16 %v865, %v862
    %v1142 = vpack.c.b16 %v869, %v866
    %v1143 = vpack.c.b16 %v870, %v867
    %v1144 = vpack.c.b16 %v871, %v868
    %v1145 = vpack.c.b16 %v875, %v872
    %v1146 = vpack.c.b16 %v876, %v873
    %v1147 = vpack.c.b16 %v877, %v874
    %v1148 = vpack.c.b16 %v881, %v878
    %v1149 = vpack.c.b16 %v882, %v879
    %v1150 = vpack.c.b16 %v883, %v880
    %v1151 = vpack.c.b16 %v887, %v884
    %v1152 = vpack.c.b16 %v888, %v885
    %v1153 = vpack.c.b16 %v889, %v886
    %v1154 = vpack.c.b16 %v893, %v890
    %v1155 = vpack.c.b16 %v894, %v891
    %v1156 = vpack.c.b16 %v895, %v892
    %v1157 = vpack.c.b16 %v899, %v896
    %v1158 = vpack.c.b16 %v900, %v897
    %v1159 = vpack.c.b16 %v901, %v898
    %v1160 = vpack.c.b16 %v905, %v902
    %v1161 = vpack.c.b16 %v906, %v903
    %v1162 = vpack.c.b16 %v907, %v904
    %v1163 = vpack.c.b16 %v911, %v908
    %v1164 = vpack.c.b16 %v912, %v909
    %v1165 = vpack.c.b16 %v913, %v910
    %v1166 = vpack.c.b16 %v917, %v914
    %v1167 = vpack.c.b16 %v918, %v915
    %v1168 = vpack.c.b16 %v919, %v916
    %v1169 = vpack.c.b16 %v923, %v920
    %v1170 = vpack.c.b16 %v924, %v921
    %v1171 = vpack.c.b16 %v925, %v922
    %v1172 = vpack.c.b16 %v929, %v926
    %v1173 = vpack.c.b16 %v930, %v927
    %v1174 = vpack.c.b16 %v931, %v928
    %v1175 = vpack.c.b16 %v935, %v932
    %v1176 = vpack.c.b16 %v936, %v933
    %v1177 = vpack.c.b16 %v937, %v934
    %v1178 = vpack.c.b16 %v941, %v938
    %v1179 = vpack.c.b16 %v942, %v939
    %v1180 = vpack.c.b16 %v943, %v940
    %v1181 = vpack.c.b16 %v947, %v944
    %v1182 = vpack.c.b16 %v948, %v945
    %v1183 = vpack.c.b16 %v949, %v946
    %v1184 = vpack.c.b16 %v953, %v950
    %v1185 = vpack.c.b16 %v954, %v951
    %v1186 = vpack.c.b16 %v955, %v952
    %v1187 = vpack.c.b16 %v959, %v956
    %v1188 = vpack.c.b16 %v960, %v957
    %v1189 = vpack.c.b16 %v961, %v958
    %v1190 = vpack.c.b16 %v965, %v962
    %v1191 = vpack.c.b16 %v966, %v963
    %v1192 = vpack.c.b16 %v967, %v964
    %v1193 = vpack.c.b16 %v971, %v968
    %v1194 = vpack.c.b16 %v972, %v969
    %v1195 = vpack.c.b16 %v973, %v970
    %v1196 = vpack.c.b16 %v977, %v974
    %v1197 = vpack.c.b16 %v978, %v975
    %v1198 = vpack.c.b16 %v979, %v976
    %v1199 = vpack.c.b16 %v983, %v980
    %v1200 = vpack.c.b16 %v984, %v981
    %v1201 = vpack.c.b16 %v985, %v982
    %v1202 = vpack.c.b16 %v989, %v986
    %v1203 = vpack.c.b16 %v990, %v987
    %v1204 = vpack.c.b16 %v991, %v988
    %v1205 = vpack.c.b16 %v995, %v992
    %v1206 = vpack.c.b16 %v996, %v993
    %v1207 = vpack.c.b16 %v997, %v994
    %v1208 = vpack.c.b16 %v1001, %v998
    %v1209 = vpack.c.b16 %v1002, %v999
    %v1210 = vpack.c.b16 %v1003, %v1000
    %v1211 = vpack.c.b16 %v1007, %v1004
    %v1212 = vpack.c.b16 %v1008, %v1005
    %v1213 = vpack.c.b16 %v1009, %v1006
    %v1214 = vpack.c.b16 %v1013, %v1010
    %v1215 = vpack.c.b16 %v1014, %v1011
    %v1216 = vpack.c.b16 %v1015, %v1012
    %v1217 = vpack.c.b16 %v1019, %v1016
    %v1218 = vpack.c.b16 %v1020, %v1017
    %v1219 = vpack.c.b16 %v1021, %v1018
    %v1220 = vpack.c.b16 %v1025, %v1022
    %v1221 = vpack.c.b16 %v1026, %v1023
    %v1222 = vpack.c.b16 %v1027, %v1024
    %v1223 = vpack.c.b16 %v1031, %v1028
    %v1224 = vpack.c.b16 %v1032, %v1029
    %v1225 = vpack.c.b16 %v1033, %v1030
    %1418 = vmatprep.subr.bf16.mxu0 %v1035
    %1419 = vmatpush1.bf16.msra.mxu0 %v1034
    %1420 = vmatprep.subr.bf16.mxu0 %v1038
    %1421 = vmatpush1.bf16.msra.mxu0 %v1037
    %1422 = vmatprep.subr.bf16.mxu0 %v1041
    %1423 = vmatpush1.bf16.msra.mxu0 %v1040
    %1424 = vmatprep.subr.bf16.mxu0 %v1044
    %1425 = vmatpush1.bf16.msra.mxu0 %v1043
    %1426 = vmatprep.subr.bf16.mxu0 %v1047
    %1427 = vmatpush1.bf16.msra.mxu0 %v1046
    %1428 = vmatprep.subr.bf16.mxu0 %v1050
    %1429 = vmatpush1.bf16.msra.mxu0 %v1049
    %1430 = vmatprep.subr.bf16.mxu0 %v1053
    %1431 = vmatpush1.bf16.msra.mxu0 %v1052
    %1432 = vmatprep.subr.bf16.mxu0 %v1056
    %1433 = vmatpush1.bf16.msra.mxu0 %v1055
    %1434 = vmatprep.subr.bf16.mxu0 %v1059
    %1435 = vmatpush1.bf16.msra.mxu0 %v1058
    %1436 = vmatprep.subr.bf16.mxu0 %v1062
    %1437 = vmatpush1.bf16.msra.mxu0 %v1061
    %1438 = vmatprep.subr.bf16.mxu0 %v1065
    %1439 = vmatpush1.bf16.msra.mxu0 %v1064
    %1440 = vmatprep.subr.bf16.mxu0 %v1068
    %1441 = vmatpush1.bf16.msra.mxu0 %v1067
    %1442 = vmatprep.subr.bf16.mxu0 %v1071
    %1443 = vmatpush1.bf16.msra.mxu0 %v1070
    %1444 = vmatprep.subr.bf16.mxu0 %v1074
    %1445 = vmatpush1.bf16.msra.mxu0 %v1073
    %1446 = vmatprep.subr.bf16.mxu0 %v1077
    %1447 = vmatpush1.bf16.msra.mxu0 %v1076
    %1448 = vmatprep.subr.bf16.mxu0 %v1080
    %1449 = vmatpush1.bf16.msra.mxu0 %v1079
    %1450 = vmatprep.mubr.bf16.mxu0 %v379
    %1451 = vmatmul.mubr.bf16.gmra.mrb[0].mxu0 %v378
    %v1452 = vpop.f32.mrb[0].mxu0
    %v1453 = vadd.f32 0.0, %v1452
    %v1454 = vpop.f32.mrb[0].mxu0
    %v1455 = vadd.f32 0.0, %v1454
    %v1456 = vpop.f32.mrb[0].mxu0
    %v1457 = vadd.f32 0.0, %v1456
    %v1458 = vpop.f32.mrb[0].mxu0
    %v1459 = vadd.f32 0.0, %v1458
    %1460 = vdwg.mxu0
    %1461 = vmatprep.subr.bf16.mxu0 %v1083
    %1462 = vmatpush1.bf16.msra.mxu0 %v1082
    %1463 = vmatprep.subr.bf16.mxu0 %v1086
    %1464 = vmatpush1.bf16.msra.mxu0 %v1085
    %1465 = vmatprep.subr.bf16.mxu0 %v1089
    %1466 = vmatpush1.bf16.msra.mxu0 %v1088
    %1467 = vmatprep.subr.bf16.mxu0 %v1092
    %1468 = vmatpush1.bf16.msra.mxu0 %v1091
    %1469 = vmatprep.subr.bf16.mxu0 %v1095
    %1470 = vmatpush1.bf16.msra.mxu0 %v1094
    %1471 = vmatprep.subr.bf16.mxu0 %v1098
    %1472 = vmatpush1.bf16.msra.mxu0 %v1097
    %1473 = vmatprep.subr.bf16.mxu0 %v1101
    %1474 = vmatpush1.bf16.msra.mxu0 %v1100
    %1475 = vmatprep.subr.bf16.mxu0 %v1104
    %1476 = vmatpush1.bf16.msra.mxu0 %v1103
    %1477 = vmatprep.subr.bf16.mxu0 %v1107
    %1478 = vmatpush1.bf16.msra.mxu0 %v1106
    %1479 = vmatprep.subr.bf16.mxu0 %v1110
    %1480 = vmatpush1.bf16.msra.mxu0 %v1109
    %1481 = vmatprep.subr.bf16.mxu0 %v1113
    %1482 = vmatpush1.bf16.msra.mxu0 %v1112
    %1483 = vmatprep.subr.bf16.mxu0 %v1116
    %1484 = vmatpush1.bf16.msra.mxu0 %v1115
    %1485 = vmatprep.subr.bf16.mxu0 %v1119
    %1486 = vmatpush1.bf16.msra.mxu0 %v1118
    %1487 = vmatprep.subr.bf16.mxu0 %v1122
    %1488 = vmatpush1.bf16.msra.mxu0 %v1121
    %1489 = vmatprep.subr.bf16.mxu0 %v1125
    %1490 = vmatpush1.bf16.msra.mxu0 %v1124
    %1491 = vmatprep.subr.bf16.mxu0 %v1128
    %1492 = vmatpush1.bf16.msra.mxu0 %v1127
    %1493 = vmatprep.mubr.bf16.mxu0 %v381
    %1494 = vmatmul.mubr.bf16.gmra.mrb[0].mxu0 %v380
    %v1495 = vpop.f32.mrb[0].mxu0
    %v1496 = vadd.f32 %v1453, %v1495
    %v1497 = vpop.f32.mrb[0].mxu0
    %v1498 = vadd.f32 %v1455, %v1497
    %v1499 = vpop.f32.mrb[0].mxu0
    %v1500 = vadd.f32 %v1457, %v1499
    %v1501 = vpop.f32.mrb[0].mxu0
    %v1502 = vadd.f32 %v1459, %v1501
    %1503 = vdwg.mxu0
    %1504 = vmatprep.subr.bf16.mxu0 %v1131
    %1505 = vmatpush1.bf16.msra.mxu0 %v1130
    %1506 = vmatprep.subr.bf16.mxu0 %v1134
    %1507 = vmatpush1.bf16.msra.mxu0 %v1133
    %1508 = vmatprep.subr.bf16.mxu0 %v1137
    %1509 = vmatpush1.bf16.msra.mxu0 %v1136
    %1510 = vmatprep.subr.bf16.mxu0 %v1140
    %1511 = vmatpush1.bf16.msra.mxu0 %v1139
    %1512 = vmatprep.subr.bf16.mxu0 %v1143
    %1513 = vmatpush1.bf16.msra.mxu0 %v1142
    %1514 = vmatprep.subr.bf16.mxu0 %v1146
    %1515 = vmatpush1.bf16.msra.mxu0 %v1145
    %1516 = vmatprep.subr.bf16.mxu0 %v1149
    %1517 = vmatpush1.bf16.msra.mxu0 %v1148
    %1518 = vmatprep.subr.bf16.mxu0 %v1152
    %1519 = vmatpush1.bf16.msra.mxu0 %v1151
    %1520 = vmatprep.subr.bf16.mxu0 %v1155
    %1521 = vmatpush1.bf16.msra.mxu0 %v1154
    %1522 = vmatprep.subr.bf16.mxu0 %v1158
    %1523 = vmatpush1.bf16.msra.mxu0 %v1157
    %1524 = vmatprep.subr.bf16.mxu0 %v1161
    %1525 = vmatpush1.bf16.msra.mxu0 %v1160
    %1526 = vmatprep.subr.bf16.mxu0 %v1164
    %1527 = vmatpush1.bf16.msra.mxu0 %v1163
    %1528 = vmatprep.subr.bf16.mxu0 %v1167
    %1529 = vmatpush1.bf16.msra.mxu0 %v1166
    %1530 = vmatprep.subr.bf16.mxu0 %v1170
    %1531 = vmatpush1.bf16.msra.mxu0 %v1169
    %1532 = vmatprep.subr.bf16.mxu0 %v1173
    %1533 = vmatpush1.bf16.msra.mxu0 %v1172
    %1534 = vmatprep.subr.bf16.mxu0 %v1176
    %1535 = vmatpush1.bf16.msra.mxu0 %v1175
    %1536 = vmatprep.mubr.bf16.mxu0 %v383
    %1537 = vmatmul.mubr.bf16.gmra.mrb[0].mxu0 %v382
    %v1538 = vpop.f32.mrb[0].mxu0
    %v1539 = vadd.f32 %v1496, %v1538
    %v1540 = vpop.f32.mrb[0].mxu0
    %v1541 = vadd.f32 %v1498, %v1540
    %v1542 = vpop.f32.mrb[0].mxu0
    %v1543 = vadd.f32 %v1500, %v1542
    %v1544 = vpop.f32.mrb[0].mxu0
    %v1545 = vadd.f32 %v1502, %v1544
    %1546 = vdwg.mxu0
    %1547 = vmatprep.subr.bf16.mxu0 %v1179
    %1548 = vmatpush1.bf16.msra.mxu0 %v1178
    %1549 = vmatprep.subr.bf16.mxu0 %v1182
    %1550 = vmatpush1.bf16.msra.mxu0 %v1181
    %1551 = vmatprep.subr.bf16.mxu0 %v1185
    %1552 = vmatpush1.bf16.msra.mxu0 %v1184
    %1553 = vmatprep.subr.bf16.mxu0 %v1188
    %1554 = vmatpush1.bf16.msra.mxu0 %v1187
    %1555 = vmatprep.subr.bf16.mxu0 %v1191
    %1556 = vmatpush1.bf16.msra.mxu0 %v1190
    %1557 = vmatprep.subr.bf16.mxu0 %v1194
    %1558 = vmatpush1.bf16.msra.mxu0 %v1193
    %1559 = vmatprep.subr.bf16.mxu0 %v1197
    %1560 = vmatpush1.bf16.msra.mxu0 %v1196
    %1561 = vmatprep.subr.bf16.mxu0 %v1200
    %1562 = vmatpush1.bf16.msra.mxu0 %v1199
    %1563 = vmatprep.subr.bf16.mxu0 %v1203
    %1564 = vmatpush1.bf16.msra.mxu0 %v1202
    %1565 = vmatprep.subr.bf16.mxu0 %v1206
    %1566 = vmatpush1.bf16.msra.mxu0 %v1205
    %1567 = vmatprep.subr.bf16.mxu0 %v1209
    %1568 = vmatpush1.bf16.msra.mxu0 %v1208
    %1569 = vmatprep.subr.bf16.mxu0 %v1212
    %1570 = vmatpush1.bf16.msra.mxu0 %v1211
    %1571 = vmatprep.subr.bf16.mxu0 %v1215
    %1572 = vmatpush1.bf16.msra.mxu0 %v1214
    %1573 = vmatprep.subr.bf16.mxu0 %v1218
    %1574 = vmatpush1.bf16.msra.mxu0 %v1217
    %1575 = vmatprep.subr.bf16.mxu0 %v1221
    %1576 = vmatpush1.bf16.msra.mxu0 %v1220
    %1577 = vmatprep.subr.bf16.mxu0 %v1224
    %1578 = vmatpush1.bf16.msra.mxu0 %v1223
    %1579 = vmatprep.mubr.bf16.mxu0 %v385
    %1580 = vmatmul.mubr.bf16.gmra.mrb[0].mxu0 %v384
    %v1581 = vpop.f32.mrb[0].mxu0
    %v1582 = vadd.f32 %v1539, %v1581
    %v1583 = vpop.f32.mrb[0].mxu0
    %v1584 = vadd.f32 %v1541, %v1583
    %v1585 = vpop.f32.mrb[0].mxu0
    %v1586 = vadd.f32 %v1543, %v1585
    %v1587 = vpop.f32.mrb[0].mxu0
    %v1588 = vadd.f32 %v1545, %v1587
    %1589 = vdwg.mxu0
    %1590 = vmatprep.subr.bf16.mxu0 0
    %1591 = vmatpush1.bf16.msra.mxu0 %v1036
    %1592 = vmatprep.subr.bf16.mxu0 0
    %1593 = vmatpush1.bf16.msra.mxu0 %v1039
    %1594 = vmatprep.subr.bf16.mxu0 0
    %1595 = vmatpush1.bf16.msra.mxu0 %v1042
    %1596 = vmatprep.subr.bf16.mxu0 0
    %1597 = vmatpush1.bf16.msra.mxu0 %v1045
    %1598 = vmatprep.subr.bf16.mxu0 0
    %1599 = vmatpush1.bf16.msra.mxu0 %v1048
    %1600 = vmatprep.subr.bf16.mxu0 0
    %1601 = vmatpush1.bf16.msra.mxu0 %v1051
    %1602 = vmatprep.subr.bf16.mxu0 0
    %1603 = vmatpush1.bf16.msra.mxu0 %v1054
    %1604 = vmatprep.subr.bf16.mxu0 0
    %1605 = vmatpush1.bf16.msra.mxu0 %v1057
    %1606 = vmatprep.subr.bf16.mxu0 0
    %1607 = vmatpush1.bf16.msra.mxu0 %v1060
    %1608 = vmatprep.subr.bf16.mxu0 0
    %1609 = vmatpush1.bf16.msra.mxu0 %v1063
    %1610 = vmatprep.subr.bf16.mxu0 0
    %1611 = vmatpush1.bf16.msra.mxu0 %v1066
    %1612 = vmatprep.subr.bf16.mxu0 0
    %1613 = vmatpush1.bf16.msra.mxu0 %v1069
    %1614 = vmatprep.subr.bf16.mxu0 0
    %1615 = vmatpush1.bf16.msra.mxu0 %v1072
    %1616 = vmatprep.subr.bf16.mxu0 0
    %1617 = vmatpush1.bf16.msra.mxu0 %v1075
    %1618 = vmatprep.subr.bf16.mxu0 0
    %1619 = vmatpush1.bf16.msra.mxu0 %v1078
    %1620 = vmatprep.subr.bf16.mxu0 0
    %1621 = vmatpush1.bf16.msra.mxu0 %v1081
    %1622 = vmatprep.mubr.bf16.mxu0 %v379
    %1623 = vmatmul.mubr.bf16.gmra.mrb[0].mxu0 %v378
    %v1624 = vpop.f32.mrb[0].mxu0
    %v1625 = vadd.f32 0.0, %v1624
    %v1626 = vpop.f32.mrb[0].mxu0
    %v1627 = vpop.f32.mrb[0].mxu0
    %v1628 = vadd.f32 0.0, %v1627
    %v1629 = vpop.f32.mrb[0].mxu0
    %1630 = vdwg.mxu0
    %1631 = vmatprep.subr.bf16.mxu0 0
    %1632 = vmatpush1.bf16.msra.mxu0 %v1084
    %1633 = vmatprep.subr.bf16.mxu0 0
    %1634 = vmatpush1.bf16.msra.mxu0 %v1087
    %1635 = vmatprep.subr.bf16.mxu0 0
    %1636 = vmatpush1.bf16.msra.mxu0 %v1090
    %1637 = vmatprep.subr.bf16.mxu0 0
    %1638 = vmatpush1.bf16.msra.mxu0 %v1093
    %1639 = vmatprep.subr.bf16.mxu0 0
    %1640 = vmatpush1.bf16.msra.mxu0 %v1096
    %1641 = vmatprep.subr.bf16.mxu0 0
    %1642 = vmatpush1.bf16.msra.mxu0 %v1099
    %1643 = vmatprep.subr.bf16.mxu0 0
    %1644 = vmatpush1.bf16.msra.mxu0 %v1102
    %1645 = vmatprep.subr.bf16.mxu0 0
    %1646 = vmatpush1.bf16.msra.mxu0 %v1105
    %1647 = vmatprep.subr.bf16.mxu0 0
    %1648 = vmatpush1.bf16.msra.mxu0 %v1108
    %1649 = vmatprep.subr.bf16.mxu0 0
    %1650 = vmatpush1.bf16.msra.mxu0 %v1111
    %1651 = vmatprep.subr.bf16.mxu0 0
    %1652 = vmatpush1.bf16.msra.mxu0 %v1114
    %1653 = vmatprep.subr.bf16.mxu0 0
    %1654 = vmatpush1.bf16.msra.mxu0 %v1117
    %1655 = vmatprep.subr.bf16.mxu0 0
    %1656 = vmatpush1.bf16.msra.mxu0 %v1120
    %1657 = vmatprep.subr.bf16.mxu0 0
    %1658 = vmatpush1.bf16.msra.mxu0 %v1123
    %1659 = vmatprep.subr.bf16.mxu0 0
    %1660 = vmatpush1.bf16.msra.mxu0 %v1126
    %1661 = vmatprep.subr.bf16.mxu0 0
    %1662 = vmatpush1.bf16.msra.mxu0 %v1129
    %1663 = vmatprep.mubr.bf16.mxu0 %v381
    %1664 = vmatmul.mubr.bf16.gmra.mrb[0].mxu0 %v380
    %v1665 = vpop.f32.mrb[0].mxu0
    %v1666 = vadd.f32 %v1625, %v1665
    %v1667 = vpop.f32.mrb[0].mxu0
    %v1668 = vpop.f32.mrb[0].mxu0
    %v1669 = vadd.f32 %v1628, %v1668
    %v1670 = vpop.f32.mrb[0].mxu0
    %1671 = vdwg.mxu0
    %1672 = vmatprep.subr.bf16.mxu0 0
    %1673 = vmatpush1.bf16.msra.mxu0 %v1132
    %1674 = vmatprep.subr.bf16.mxu0 0
    %1675 = vmatpush1.bf16.msra.mxu0 %v1135
    %1676 = vmatprep.subr.bf16.mxu0 0
    %1677 = vmatpush1.bf16.msra.mxu0 %v1138
    %1678 = vmatprep.subr.bf16.mxu0 0
    %1679 = vmatpush1.bf16.msra.mxu0 %v1141
    %1680 = vmatprep.subr.bf16.mxu0 0
    %1681 = vmatpush1.bf16.msra.mxu0 %v1144
    %1682 = vmatprep.subr.bf16.mxu0 0
    %1683 = vmatpush1.bf16.msra.mxu0 %v1147
    %1684 = vmatprep.subr.bf16.mxu0 0
    %1685 = vmatpush1.bf16.msra.mxu0 %v1150
    %1686 = vmatprep.subr.bf16.mxu0 0
    %1687 = vmatpush1.bf16.msra.mxu0 %v1153
    %1688 = vmatprep.subr.bf16.mxu0 0
    %1689 = vmatpush1.bf16.msra.mxu0 %v1156
    %1690 = vmatprep.subr.bf16.mxu0 0
    %1691 = vmatpush1.bf16.msra.mxu0 %v1159
    %1692 = vmatprep.subr.bf16.mxu0 0
    %1693 = vmatpush1.bf16.msra.mxu0 %v1162
    %1694 = vmatprep.subr.bf16.mxu0 0
    %1695 = vmatpush1.bf16.msra.mxu0 %v1165
    %1696 = vmatprep.subr.bf16.mxu0 0
    %1697 = vmatpush1.bf16.msra.mxu0 %v1168
    %1698 = vmatprep.subr.bf16.mxu0 0
    %1699 = vmatpush1.bf16.msra.mxu0 %v1171
    %1700 = vmatprep.subr.bf16.mxu0 0
    %1701 = vmatpush1.bf16.msra.mxu0 %v1174
    %1702 = vmatprep.subr.bf16.mxu0 0
    %1703 = vmatpush1.bf16.msra.mxu0 %v1177
    %1704 = vmatprep.mubr.bf16.mxu0 %v383
    %1705 = vmatmul.mubr.bf16.gmra.mrb[0].mxu0 %v382
    %v1706 = vpop.f32.mrb[0].mxu0
    %v1707 = vadd.f32 %v1666, %v1706
    %v1708 = vpop.f32.mrb[0].mxu0
    %v1709 = vpop.f32.mrb[0].mxu0
    %v1710 = vadd.f32 %v1669, %v1709
    %v1711 = vpop.f32.mrb[0].mxu0
    %1712 = vdwg.mxu0
    %1713 = vmatprep.subr.bf16.mxu0 0
    %1714 = vmatpush1.bf16.msra.mxu0 %v1180
    %1715 = vmatprep.subr.bf16.mxu0 0
    %1716 = vmatpush1.bf16.msra.mxu0 %v1183
    %1717 = vmatprep.subr.bf16.mxu0 0
    %1718 = vmatpush1.bf16.msra.mxu0 %v1186
    %1719 = vmatprep.subr.bf16.mxu0 0
    %1720 = vmatpush1.bf16.msra.mxu0 %v1189
    %1721 = vmatprep.subr.bf16.mxu0 0
    %1722 = vmatpush1.bf16.msra.mxu0 %v1192
    %1723 = vmatprep.subr.bf16.mxu0 0
    %1724 = vmatpush1.bf16.msra.mxu0 %v1195
    %1725 = vmatprep.subr.bf16.mxu0 0
    %1726 = vmatpush1.bf16.msra.mxu0 %v1198
    %1727 = vmatprep.subr.bf16.mxu0 0
    %1728 = vmatpush1.bf16.msra.mxu0 %v1201
    %1729 = vmatprep.subr.bf16.mxu0 0
    %1730 = vmatpush1.bf16.msra.mxu0 %v1204
    %1731 = vmatprep.subr.bf16.mxu0 0
    %1732 = vmatpush1.bf16.msra.mxu0 %v1207
    %1733 = vmatprep.subr.bf16.mxu0 0
    %1734 = vmatpush1.bf16.msra.mxu0 %v1210
    %1735 = vmatprep.subr.bf16.mxu0 0
    %1736 = vmatpush1.bf16.msra.mxu0 %v1213
    %1737 = vmatprep.subr.bf16.mxu0 0
    %1738 = vmatpush1.bf16.msra.mxu0 %v1216
    %1739 = vmatprep.subr.bf16.mxu0 0
    %1740 = vmatpush1.bf16.msra.mxu0 %v1219
    %1741 = vmatprep.subr.bf16.mxu0 0
    %1742 = vmatpush1.bf16.msra.mxu0 %v1222
    %1743 = vmatprep.subr.bf16.mxu0 0
    %1744 = vmatpush1.bf16.msra.mxu0 %v1225
    %1745 = vmatprep.mubr.bf16.mxu0 %v385
    %1746 = vmatmul.mubr.bf16.gmra.mrb[0].mxu0 %v384
    %v1747 = vpop.f32.mrb[0].mxu0
    %v1748 = vadd.f32 %v1707, %v1747
    %v1749 = vpop.f32.mrb[0].mxu0
    %v1750 = vpop.f32.mrb[0].mxu0
    %v1751 = vadd.f32 %v1710, %v1750
    %v1752 = vpop.f32.mrb[0].mxu0
    %1753 = vdwg.mxu0
    %v1754 = vadd.f32 %v84, %v1582
    %v1755 = vadd.f32 %v85, %v1584
    %v1756 = vadd.f32 %v86, %v1748
    %v1757 = vadd.f32 %v87, %v1586
    %v1758 = vadd.f32 %v88, %v1588
    %v1759 = vadd.f32 %v89, %v1751
    %1760 = vst [vmem:[#allocation2] sm:$0xff] %v1754
    %1761 = vst [vmem:[#allocation2 + $0x8] sm:$0xff] %v1755
    %1762 = vst [vmem:[#allocation2 + $0x10] sm:$0xff] %v1756
    %1763 = vst [vmem:[#allocation2 + $0x18] sm:$0xff] %v1757
    %1764 = vst [vmem:[#allocation2 + $0x20] sm:$0xff] %v1758
    %1765 = vst [vmem:[#allocation2 + $0x28] sm:$0xff] %v1759
    // Predicated region
    $region38: #{tpu_custom_call.1} parent=1 // pred_check
      %p1766 = pneg %p74
    $region39: #{tpu_custom_call.1} parent=1 // pred_check_branch
      %1768 = sbr.rel (%p1766) target = $region41
    $region40: #{tpu_custom_call.1} parent=1 // pred_region
      %v1769 = vld [vmem:[#allocation2] sm:$0xff]
      %v1770 = vld [vmem:[#allocation2 + $0x8] sm:$0xff]
      %v1771 = vld [vmem:[#allocation2 + $0x10] sm:$0xff]
      %v1772 = vld [vmem:[#allocation2 + $0x18] sm:$0xff]
      %v1773 = vld [vmem:[#allocation2 + $0x20] sm:$0xff]
      %v1774 = vld [vmem:[#allocation2 + $0x28] sm:$0xff]
      %v1775 = vpack.c.bf16 %v1772, %v1769
      %v1776 = vpack.c.bf16 %v1773, %v1770
      %v1777 = vpack.c.bf16 %v1774, %v1771
      %v1778 = vld [vmem:[#allocation9] sm:$0xff]
      %v1779 = vld [vmem:[#allocation9 + $0x8] sm:$0xf]
      %v1780 = vld [vmem:[#allocation9 + $0xc] sm:$0xff]
      %v1781 = vld [vmem:[#allocation9 + $0x14] sm:$0xf]
      %v1782 = vld [vmem:[#allocation9 + $0x18] sm:$0xff]
      %v1783 = vld [vmem:[#allocation9 + $0x20] sm:$0xf]
      %v1784 = vld [vmem:[#allocation9 + $0x24] sm:$0xff]
      %v1785 = vld [vmem:[#allocation9 + $0x2c] sm:$0xf]
      %v1786 = vld [vmem:[#allocation9 + $0x30] sm:$0xff]
      %v1787 = vld [vmem:[#allocation9 + $0x38] sm:$0xf]
      %v1788 = vld [vmem:[#allocation9 + $0x3c] sm:$0xff]
      %v1789 = vld [vmem:[#allocation9 + $0x44] sm:$0xf]
      %v1790 = vld [vmem:[#allocation9 + $0x48] sm:$0xff]
      %v1791 = vld [vmem:[#allocation9 + $0x50] sm:$0xf]
      %v1792 = vld [vmem:[#allocation9 + $0x54] sm:$0xff]
      %v1793 = vld [vmem:[#allocation9 + $0x5c] sm:$0xf]
      %v1794 = vld [vmem:[#allocation9 + $0x60] sm:$0xff]
      %v1795 = vld [vmem:[#allocation9 + $0x68] sm:$0xf]
      %v1796 = vld [vmem:[#allocation9 + $0x6c] sm:$0xff]
      %v1797 = vld [vmem:[#allocation9 + $0x74] sm:$0xf]
      %v1798 = vld [vmem:[#allocation9 + $0x78] sm:$0xff]
      %v1799 = vld [vmem:[#allocation9 + $0x80] sm:$0xf]
      %v1800 = vld [vmem:[#allocation9 + $0x84] sm:$0xff]
      %v1801 = vld [vmem:[#allocation9 + $0x8c] sm:$0xf]
      %v1802 = vld [vmem:[#allocation9 + $0x90] sm:$0xff]
      %v1803 = vld [vmem:[#allocation9 + $0x98] sm:$0xf]
      %v1804 = vld [vmem:[#allocation9 + $0x9c] sm:$0xff]
      %v1805 = vld [vmem:[#allocation9 + $0xa4] sm:$0xf]
      %v1806 = vld [vmem:[#allocation9 + $0xa8] sm:$0xff]
      %v1807 = vld [vmem:[#allocation9 + $0xb0] sm:$0xf]
      %v1808 = vld [vmem:[#allocation9 + $0xb4] sm:$0xff]
      %v1809 = vld [vmem:[#allocation9 + $0xbc] sm:$0xf]
      %v1810 = vld [vmem:[#allocation9 + $0xc0] sm:$0xff]
      %v1811 = vld [vmem:[#allocation9 + $0xc8] sm:$0xf]
      %v1812 = vld [vmem:[#allocation9 + $0xcc] sm:$0xff]
      %v1813 = vld [vmem:[#allocation9 + $0xd4] sm:$0xf]
      %v1814 = vld [vmem:[#allocation9 + $0xd8] sm:$0xff]
      %v1815 = vld [vmem:[#allocation9 + $0xe0] sm:$0xf]
      %v1816 = vld [vmem:[#allocation9 + $0xe4] sm:$0xff]
      %v1817 = vld [vmem:[#allocation9 + $0xec] sm:$0xf]
      %v1818 = vld [vmem:[#allocation9 + $0xf0] sm:$0xff]
      %v1819 = vld [vmem:[#allocation9 + $0xf8] sm:$0xf]
      %v1820 = vld [vmem:[#allocation9 + $0xfc] sm:$0xff]
      %v1821 = vld [vmem:[#allocation9 + $0x104] sm:$0xf]
      %v1822 = vld [vmem:[#allocation9 + $0x108] sm:$0xff]
      %v1823 = vld [vmem:[#allocation9 + $0x110] sm:$0xf]
      %v1824 = vld [vmem:[#allocation9 + $0x114] sm:$0xff]
      %v1825 = vld [vmem:[#allocation9 + $0x11c] sm:$0xf]
      %v1826 = vld [vmem:[#allocation9 + $0x120] sm:$0xff]
      %v1827 = vld [vmem:[#allocation9 + $0x128] sm:$0xf]
      %v1828 = vld [vmem:[#allocation9 + $0x12c] sm:$0xff]
      %v1829 = vld [vmem:[#allocation9 + $0x134] sm:$0xf]
      %v1830 = vld [vmem:[#allocation9 + $0x138] sm:$0xff]
      %v1831 = vld [vmem:[#allocation9 + $0x140] sm:$0xf]
      %v1832 = vld [vmem:[#allocation9 + $0x144] sm:$0xff]
      %v1833 = vld [vmem:[#allocation9 + $0x14c] sm:$0xf]
      %v1834 = vld [vmem:[#allocation9 + $0x150] sm:$0xff]
      %v1835 = vld [vmem:[#allocation9 + $0x158] sm:$0xf]
      %v1836 = vld [vmem:[#allocation9 + $0x15c] sm:$0xff]
      %v1837 = vld [vmem:[#allocation9 + $0x164] sm:$0xf]
      %v1838 = vld [vmem:[#allocation9 + $0x168] sm:$0xff]
      %v1839 = vld [vmem:[#allocation9 + $0x170] sm:$0xf]
      %v1840 = vld [vmem:[#allocation9 + $0x174] sm:$0xff]
      %v1841 = vld [vmem:[#allocation9 + $0x17c] sm:$0xf]
      %v1842 = vld [vmem:[#allocation9 + $0x180] sm:$0xff]
      %v1843 = vld [vmem:[#allocation9 + $0x188] sm:$0xf]
      %v1844 = vld [vmem:[#allocation9 + $0x18c] sm:$0xff]
      %v1845 = vld [vmem:[#allocation9 + $0x194] sm:$0xf]
      %v1846 = vld [vmem:[#allocation9 + $0x198] sm:$0xff]
      %v1847 = vld [vmem:[#allocation9 + $0x1a0] sm:$0xf]
      %v1848 = vld [vmem:[#allocation9 + $0x1a4] sm:$0xff]
      %v1849 = vld [vmem:[#allocation9 + $0x1ac] sm:$0xf]
      %v1850 = vld [vmem:[#allocation9 + $0x1b0] sm:$0xff]
      %v1851 = vld [vmem:[#allocation9 + $0x1b8] sm:$0xf]
      %v1852 = vld [vmem:[#allocation9 + $0x1bc] sm:$0xff]
      %v1853 = vld [vmem:[#allocation9 + $0x1c4] sm:$0xf]
      %v1854 = vld [vmem:[#allocation9 + $0x1c8] sm:$0xff]
      %v1855 = vld [vmem:[#allocation9 + $0x1d0] sm:$0xf]
      %v1856 = vld [vmem:[#allocation9 + $0x1d4] sm:$0xff]
      %v1857 = vld [vmem:[#allocation9 + $0x1dc] sm:$0xf]
      %v1858 = vld [vmem:[#allocation9 + $0x1e0] sm:$0xff]
      %v1859 = vld [vmem:[#allocation9 + $0x1e8] sm:$0xf]
      %v1860 = vld [vmem:[#allocation9 + $0x1ec] sm:$0xff]
      %v1861 = vld [vmem:[#allocation9 + $0x1f4] sm:$0xf]
      %v1862 = vld [vmem:[#allocation9 + $0x1f8] sm:$0xff]
      %v1863 = vld [vmem:[#allocation9 + $0x200] sm:$0xf]
      %v1864 = vld [vmem:[#allocation9 + $0x204] sm:$0xff]
      %v1865 = vld [vmem:[#allocation9 + $0x20c] sm:$0xf]
      %v1866 = vld [vmem:[#allocation9 + $0x210] sm:$0xff]
      %v1867 = vld [vmem:[#allocation9 + $0x218] sm:$0xf]
      %v1868 = vld [vmem:[#allocation9 + $0x21c] sm:$0xff]
      %v1869 = vld [vmem:[#allocation9 + $0x224] sm:$0xf]
      %v1870 = vld [vmem:[#allocation9 + $0x228] sm:$0xff]
      %v1871 = vld [vmem:[#allocation9 + $0x230] sm:$0xf]
      %v1872 = vld [vmem:[#allocation9 + $0x234] sm:$0xff]
      %v1873 = vld [vmem:[#allocation9 + $0x23c] sm:$0xf]
      %v1874 = vld [vmem:[#allocation8] sm:$0xff]
      %v1875 = vld [vmem:[#allocation8 + $0x8] sm:$0xff]
      %v1876 = vld [vmem:[#allocation8 + $0x10] sm:$0xff]
      %v1877 = vld [vmem:[#allocation8 + $0x18] sm:$0xff]
      %v1878 = vld [vmem:[#allocation8 + $0x20] sm:$0xff]
      %v1879 = vld [vmem:[#allocation8 + $0x28] sm:$0xff]
      %v1976 = vunpack.c.l.b16 %v1778
      %v1977 = vunpack.c.h.b16 %v1778
      %v1978 = vunpack.c.l.b16 %v1779
      %v1979 = vunpack.c.l.b16 %v1780
      %v1980 = vunpack.c.h.b16 %v1780
      %v1981 = vunpack.c.l.b16 %v1781
      %v1982 = vunpack.c.l.b16 %v1782
      %v1983 = vunpack.c.h.b16 %v1782
      %v1984 = vunpack.c.l.b16 %v1783
      %v1985 = vunpack.c.l.b16 %v1784
      %v1986 = vunpack.c.h.b16 %v1784
      %v1987 = vunpack.c.l.b16 %v1785
      %v1988 = vunpack.c.l.b16 %v1786
      %v1989 = vunpack.c.h.b16 %v1786
      %v1990 = vunpack.c.l.b16 %v1787
      %v1991 = vunpack.c.l.b16 %v1788
      %v1992 = vunpack.c.h.b16 %v1788
      %v1993 = vunpack.c.l.b16 %v1789
      %v1994 = vunpack.c.l.b16 %v1790
      %v1995 = vunpack.c.h.b16 %v1790
      %v1996 = vunpack.c.l.b16 %v1791
      %v1997 = vunpack.c.l.b16 %v1792
      %v1998 = vunpack.c.h.b16 %v1792
      %v1999 = vunpack.c.l.b16 %v1793
      %v2000 = vunpack.c.l.b16 %v1794
      %v2001 = vunpack.c.h.b16 %v1794
      %v2002 = vunpack.c.l.b16 %v1795
      %v2003 = vunpack.c.l.b16 %v1796
      %v2004 = vunpack.c.h.b16 %v1796
      %v2005 = vunpack.c.l.b16 %v1797
      %v2006 = vunpack.c.l.b16 %v1798
      %v2007 = vunpack.c.h.b16 %v1798
      %v2008 = vunpack.c.l.b16 %v1799
      %v2009 = vunpack.c.l.b16 %v1800
      %v2010 = vunpack.c.h.b16 %v1800
      %v2011 = vunpack.c.l.b16 %v1801
      %v2012 = vunpack.c.l.b16 %v1802
      %v2013 = vunpack.c.h.b16 %v1802
      %v2014 = vunpack.c.l.b16 %v1803
      %v2015 = vunpack.c.l.b16 %v1804
      %v2016 = vunpack.c.h.b16 %v1804
      %v2017 = vunpack.c.l.b16 %v1805
      %v2018 = vunpack.c.l.b16 %v1806
      %v2019 = vunpack.c.h.b16 %v1806
      %v2020 = vunpack.c.l.b16 %v1807
      %v2021 = vunpack.c.l.b16 %v1808
      %v2022 = vunpack.c.h.b16 %v1808
      %v2023 = vunpack.c.l.b16 %v1809
      %v2024 = vunpack.c.l.b16 %v1810
      %v2025 = vunpack.c.h.b16 %v1810
      %v2026 = vunpack.c.l.b16 %v1811
      %v2027 = vunpack.c.l.b16 %v1812
      %v2028 = vunpack.c.h.b16 %v1812
      %v2029 = vunpack.c.l.b16 %v1813
      %v2030 = vunpack.c.l.b16 %v1814
      %v2031 = vunpack.c.h.b16 %v1814
      %v2032 = vunpack.c.l.b16 %v1815
      %v2033 = vunpack.c.l.b16 %v1816
      %v2034 = vunpack.c.h.b16 %v1816
      %v2035 = vunpack.c.l.b16 %v1817
      %v2036 = vunpack.c.l.b16 %v1818
      %v2037 = vunpack.c.h.b16 %v1818
      %v2038 = vunpack.c.l.b16 %v1819
      %v2039 = vunpack.c.l.b16 %v1820
      %v2040 = vunpack.c.h.b16 %v1820
      %v2041 = vunpack.c.l.b16 %v1821
      %v2042 = vunpack.c.l.b16 %v1822
      %v2043 = vunpack.c.h.b16 %v1822
      %v2044 = vunpack.c.l.b16 %v1823
      %v2045 = vunpack.c.l.b16 %v1824
      %v2046 = vunpack.c.h.b16 %v1824
      %v2047 = vunpack.c.l.b16 %v1825
      %v2048 = vunpack.c.l.b16 %v1826
      %v2049 = vunpack.c.h.b16 %v1826
      %v2050 = vunpack.c.l.b16 %v1827
      %v2051 = vunpack.c.l.b16 %v1828
      %v2052 = vunpack.c.h.b16 %v1828
      %v2053 = vunpack.c.l.b16 %v1829
      %v2054 = vunpack.c.l.b16 %v1830
      %v2055 = vunpack.c.h.b16 %v1830
      %v2056 = vunpack.c.l.b16 %v1831
      %v2057 = vunpack.c.l.b16 %v1832
      %v2058 = vunpack.c.h.b16 %v1832
      %v2059 = vunpack.c.l.b16 %v1833
      %v2060 = vunpack.c.l.b16 %v1834
      %v2061 = vunpack.c.h.b16 %v1834
      %v2062 = vunpack.c.l.b16 %v1835
      %v2063 = vunpack.c.l.b16 %v1836
      %v2064 = vunpack.c.h.b16 %v1836
      %v2065 = vunpack.c.l.b16 %v1837
      %v2066 = vunpack.c.l.b16 %v1838
      %v2067 = vunpack.c.h.b16 %v1838
      %v2068 = vunpack.c.l.b16 %v1839
      %v2069 = vunpack.c.l.b16 %v1840
      %v2070 = vunpack.c.h.b16 %v1840
      %v2071 = vunpack.c.l.b16 %v1841
      %v2072 = vunpack.c.l.b16 %v1842
      %v2073 = vunpack.c.h.b16 %v1842
      %v2074 = vunpack.c.l.b16 %v1843
      %v2075 = vunpack.c.l.b16 %v1844
      %v2076 = vunpack.c.h.b16 %v1844
      %v2077 = vunpack.c.l.b16 %v1845
      %v2078 = vunpack.c.l.b16 %v1846
      %v2079 = vunpack.c.h.b16 %v1846
      %v2080 = vunpack.c.l.b16 %v1847
      %v2081 = vunpack.c.l.b16 %v1848
      %v2082 = vunpack.c.h.b16 %v1848
      %v2083 = vunpack.c.l.b16 %v1849
      %v2084 = vunpack.c.l.b16 %v1850
      %v2085 = vunpack.c.h.b16 %v1850
      %v2086 = vunpack.c.l.b16 %v1851
      %v2087 = vunpack.c.l.b16 %v1852
      %v2088 = vunpack.c.h.b16 %v1852
      %v2089 = vunpack.c.l.b16 %v1853
      %v2090 = vunpack.c.l.b16 %v1854
      %v2091 = vunpack.c.h.b16 %v1854
      %v2092 = vunpack.c.l.b16 %v1855
      %v2093 = vunpack.c.l.b16 %v1856
      %v2094 = vunpack.c.h.b16 %v1856
      %v2095 = vunpack.c.l.b16 %v1857
      %v2096 = vunpack.c.l.b16 %v1858
      %v2097 = vunpack.c.h.b16 %v1858
      %v2098 = vunpack.c.l.b16 %v1859
      %v2099 = vunpack.c.l.b16 %v1860
      %v2100 = vunpack.c.h.b16 %v1860
      %v2101 = vunpack.c.l.b16 %v1861
      %v2102 = vunpack.c.l.b16 %v1862
      %v2103 = vunpack.c.h.b16 %v1862
      %v2104 = vunpack.c.l.b16 %v1863
      %v2105 = vunpack.c.l.b16 %v1864
      %v2106 = vunpack.c.h.b16 %v1864
      %v2107 = vunpack.c.l.b16 %v1865
      %v2108 = vunpack.c.l.b16 %v1866
      %v2109 = vunpack.c.h.b16 %v1866
      %v2110 = vunpack.c.l.b16 %v1867
      %v2111 = vunpack.c.l.b16 %v1868
      %v2112 = vunpack.c.h.b16 %v1868
      %v2113 = vunpack.c.l.b16 %v1869
      %v2114 = vunpack.c.l.b16 %v1870
      %v2115 = vunpack.c.h.b16 %v1870
      %v2116 = vunpack.c.l.b16 %v1871
      %v2117 = vunpack.c.l.b16 %v1872
      %v2118 = vunpack.c.h.b16 %v1872
      %v2119 = vunpack.c.l.b16 %v1873
      %v2120 = vpack.c.b16 %v1979, %v1976
      %v2121 = vpack.c.b16 %v1980, %v1977
      %v2122 = vpack.c.b16 %v1981, %v1978
      %v2123 = vpack.c.b16 %v1985, %v1982
      %v2124 = vpack.c.b16 %v1986, %v1983
      %v2125 = vpack.c.b16 %v1987, %v1984
      %v2126 = vpack.c.b16 %v1991, %v1988
      %v2127 = vpack.c.b16 %v1992, %v1989
      %v2128 = vpack.c.b16 %v1993, %v1990
      %v2129 = vpack.c.b16 %v1997, %v1994
      %v2130 = vpack.c.b16 %v1998, %v1995
      %v2131 = vpack.c.b16 %v1999, %v1996
      %v2132 = vpack.c.b16 %v2003, %v2000
      %v2133 = vpack.c.b16 %v2004, %v2001
      %v2134 = vpack.c.b16 %v2005, %v2002
      %v2135 = vpack.c.b16 %v2009, %v2006
      %v2136 = vpack.c.b16 %v2010, %v2007
      %v2137 = vpack.c.b16 %v2011, %v2008
      %v2138 = vpack.c.b16 %v2015, %v2012
      %v2139 = vpack.c.b16 %v2016, %v2013
      %v2140 = vpack.c.b16 %v2017, %v2014
      %v2141 = vpack.c.b16 %v2021, %v2018
      %v2142 = vpack.c.b16 %v2022, %v2019
      %v2143 = vpack.c.b16 %v2023, %v2020
      %v2144 = vpack.c.b16 %v2027, %v2024
      %v2145 = vpack.c.b16 %v2028, %v2025
      %v2146 = vpack.c.b16 %v2029, %v2026
      %v2147 = vpack.c.b16 %v2033, %v2030
      %v2148 = vpack.c.b16 %v2034, %v2031
      %v2149 = vpack.c.b16 %v2035, %v2032
      %v2150 = vpack.c.b16 %v2039, %v2036
      %v2151 = vpack.c.b16 %v2040, %v2037
      %v2152 = vpack.c.b16 %v2041, %v2038
      %v2153 = vpack.c.b16 %v2045, %v2042
      %v2154 = vpack.c.b16 %v2046, %v2043
      %v2155 = vpack.c.b16 %v2047, %v2044
      %v2156 = vpack.c.b16 %v2051, %v2048
      %v2157 = vpack.c.b16 %v2052, %v2049
      %v2158 = vpack.c.b16 %v2053, %v2050
      %v2159 = vpack.c.b16 %v2057, %v2054
      %v2160 = vpack.c.b16 %v2058, %v2055
      %v2161 = vpack.c.b16 %v2059, %v2056
      %v2162 = vpack.c.b16 %v2063, %v2060
      %v2163 = vpack.c.b16 %v2064, %v2061
      %v2164 = vpack.c.b16 %v2065, %v2062
      %v2165 = vpack.c.b16 %v2069, %v2066
      %v2166 = vpack.c.b16 %v2070, %v2067
      %v2167 = vpack.c.b16 %v2071, %v2068
      %v2168 = vpack.c.b16 %v2075, %v2072
      %v2169 = vpack.c.b16 %v2076, %v2073
      %v2170 = vpack.c.b16 %v2077, %v2074
      %v2171 = vpack.c.b16 %v2081, %v2078
      %v2172 = vpack.c.b16 %v2082, %v2079
      %v2173 = vpack.c.b16 %v2083, %v2080
      %v2174 = vpack.c.b16 %v2087, %v2084
      %v2175 = vpack.c.b16 %v2088, %v2085
      %v2176 = vpack.c.b16 %v2089, %v2086
      %v2177 = vpack.c.b16 %v2093, %v2090
      %v2178 = vpack.c.b16 %v2094, %v2091
      %v2179 = vpack.c.b16 %v2095, %v2092
      %v2180 = vpack.c.b16 %v2099, %v2096
      %v2181 = vpack.c.b16 %v2100, %v2097
      %v2182 = vpack.c.b16 %v2101, %v2098
      %v2183 = vpack.c.b16 %v2105, %v2102
      %v2184 = vpack.c.b16 %v2106, %v2103
      %v2185 = vpack.c.b16 %v2107, %v2104
      %v2186 = vpack.c.b16 %v2111, %v2108
      %v2187 = vpack.c.b16 %v2112, %v2109
      %v2188 = vpack.c.b16 %v2113, %v2110
      %v2189 = vpack.c.b16 %v2117, %v2114
      %v2190 = vpack.c.b16 %v2118, %v2115
      %v2191 = vpack.c.b16 %v2119, %v2116
      %2264 = vmatprep.subr.bf16.mxu0 %v2121
      %2265 = vmatpush1.bf16.msra.mxu0 %v2120
      %2266 = vmatprep.subr.bf16.mxu0 %v2124
      %2267 = vmatpush1.bf16.msra.mxu0 %v2123
      %2268 = vmatprep.subr.bf16.mxu0 %v2127
      %2269 = vmatpush1.bf16.msra.mxu0 %v2126
      %2270 = vmatprep.subr.bf16.mxu0 %v2130
      %2271 = vmatpush1.bf16.msra.mxu0 %v2129
      %2272 = vmatprep.subr.bf16.mxu0 %v2133
      %2273 = vmatpush1.bf16.msra.mxu0 %v2132
      %2274 = vmatprep.subr.bf16.mxu0 %v2136
      %2275 = vmatpush1.bf16.msra.mxu0 %v2135
      %2276 = vmatprep.subr.bf16.mxu0 %v2139
      %2277 = vmatpush1.bf16.msra.mxu0 %v2138
      %2278 = vmatprep.subr.bf16.mxu0 %v2142
      %2279 = vmatpush1.bf16.msra.mxu0 %v2141
      %2280 = vmatprep.subr.bf16.mxu0 %v2145
      %2281 = vmatpush1.bf16.msra.mxu0 %v2144
      %2282 = vmatprep.subr.bf16.mxu0 %v2148
      %2283 = vmatpush1.bf16.msra.mxu0 %v2147
      %2284 = vmatprep.subr.bf16.mxu0 %v2151
      %2285 = vmatpush1.bf16.msra.mxu0 %v2150
      %2286 = vmatprep.subr.bf16.mxu0 %v2154
      %2287 = vmatpush1.bf16.msra.mxu0 %v2153
      %2288 = vmatprep.subr.bf16.mxu0 %v2157
      %2289 = vmatpush1.bf16.msra.mxu0 %v2156
      %2290 = vmatprep.subr.bf16.mxu0 %v2160
      %2291 = vmatpush1.bf16.msra.mxu0 %v2159
      %2292 = vmatprep.subr.bf16.mxu0 %v2163
      %2293 = vmatpush1.bf16.msra.mxu0 %v2162
      %2294 = vmatprep.subr.bf16.mxu0 %v2166
      %2295 = vmatpush1.bf16.msra.mxu0 %v2165
      %2296 = vmatprep.mubr.bf16.mxu0 %v1776
      %2297 = vmatmul.mubr.bf16.gmra.mrb[0].mxu0 %v1775
      %v2298 = vpop.f32.mrb[0].mxu0
      %v2299 = vadd.f32 %v1874, %v2298
      %v2300 = vpop.f32.mrb[0].mxu0
      %v2301 = vadd.f32 %v1875, %v2300
      %v2302 = vpop.f32.mrb[0].mxu0
      %v2303 = vadd.f32 %v1877, %v2302
      %v2304 = vpop.f32.mrb[0].mxu0
      %v2305 = vadd.f32 %v1878, %v2304
      %2306 = vdwg.mxu0
      %2307 = vmatprep.subr.bf16.mxu0 %v2169
      %2308 = vmatpush1.bf16.msra.mxu0 %v2168
      %2309 = vmatprep.subr.bf16.mxu0 %v2172
      %2310 = vmatpush1.bf16.msra.mxu0 %v2171
      %2311 = vmatprep.subr.bf16.mxu0 %v2175
      %2312 = vmatpush1.bf16.msra.mxu0 %v2174
      %2313 = vmatprep.subr.bf16.mxu0 %v2178
      %2314 = vmatpush1.bf16.msra.mxu0 %v2177
      %2315 = vmatprep.subr.bf16.mxu0 %v2181
      %2316 = vmatpush1.bf16.msra.mxu0 %v2180
      %2317 = vmatprep.subr.bf16.mxu0 %v2184
      %2318 = vmatpush1.bf16.msra.mxu0 %v2183
      %2319 = vmatprep.subr.bf16.mxu0 %v2187
      %2320 = vmatpush1.bf16.msra.mxu0 %v2186
      %2321 = vmatprep.subr.bf16.mxu0 %v2190
      %2322 = vmatpush1.bf16.msra.mxu0 %v2189
      %2323 = vmatprep.subr.bf16.mxu0 0
      %2324 = vmatpush1.bf16.msra.mxu0 0
      %2325 = vmatprep.subr.bf16.mxu0 0
      %2326 = vmatpush1.bf16.msra.mxu0 0
      %2327 = vmatprep.subr.bf16.mxu0 0
      %2328 = vmatpush1.bf16.msra.mxu0 0
      %2329 = vmatprep.subr.bf16.mxu0 0
      %2330 = vmatpush1.bf16.msra.mxu0 0
      %2331 = vmatprep.subr.bf16.mxu0 0
      %2332 = vmatpush1.bf16.msra.mxu0 0
      %2333 = vmatprep.subr.bf16.mxu0 0
      %2334 = vmatpush1.bf16.msra.mxu0 0
      %2335 = vmatprep.subr.bf16.mxu0 0
      %2336 = vmatpush1.bf16.msra.mxu0 0
      %2337 = vmatprep.subr.bf16.mxu0 0
      %2338 = vmatpush1.bf16.msra.mxu0 0
      %2339 = vmatprep.mubr.bf16.mxu0 0
      %2340 = vmatmul.mubr.bf16.gmra.mrb[0].mxu0 %v1777
      %v2341 = vpop.f32.mrb[0].mxu0
      %v2342 = vadd.f32 %v2299, %v2341
      %v2343 = vpop.f32.mrb[0].mxu0
      %v2344 = vadd.f32 %v2301, %v2343
      %v2345 = vpop.f32.mrb[0].mxu0
      %v2346 = vadd.f32 %v2303, %v2345
      %v2347 = vpop.f32.mrb[0].mxu0
      %v2348 = vadd.f32 %v2305, %v2347
      %2349 = vdwg.mxu0
      %2350 = vmatprep.subr.bf16.mxu0 0
      %2351 = vmatpush1.bf16.msra.mxu0 %v2122
      %2352 = vmatprep.subr.bf16.mxu0 0
      %2353 = vmatpush1.bf16.msra.mxu0 %v2125
      %2354 = vmatprep.subr.bf16.mxu0 0
      %2355 = vmatpush1.bf16.msra.mxu0 %v2128
      %2356 = vmatprep.subr.bf16.mxu0 0
      %2357 = vmatpush1.bf16.msra.mxu0 %v2131
      %2358 = vmatprep.subr.bf16.mxu0 0
      %2359 = vmatpush1.bf16.msra.mxu0 %v2134
      %2360 = vmatprep.subr.bf16.mxu0 0
      %2361 = vmatpush1.bf16.msra.mxu0 %v2137
      %2362 = vmatprep.subr.bf16.mxu0 0
      %2363 = vmatpush1.bf16.msra.mxu0 %v2140
      %2364 = vmatprep.subr.bf16.mxu0 0
      %2365 = vmatpush1.bf16.msra.mxu0 %v2143
      %2366 = vmatprep.subr.bf16.mxu0 0
      %2367 = vmatpush1.bf16.msra.mxu0 %v2146
      %2368 = vmatprep.subr.bf16.mxu0 0
      %2369 = vmatpush1.bf16.msra.mxu0 %v2149
      %2370 = vmatprep.subr.bf16.mxu0 0
      %2371 = vmatpush1.bf16.msra.mxu0 %v2152
      %2372 = vmatprep.subr.bf16.mxu0 0
      %2373 = vmatpush1.bf16.msra.mxu0 %v2155
      %2374 = vmatprep.subr.bf16.mxu0 0
      %2375 = vmatpush1.bf16.msra.mxu0 %v2158
      %2376 = vmatprep.subr.bf16.mxu0 0
      %2377 = vmatpush1.bf16.msra.mxu0 %v2161
      %2378 = vmatprep.subr.bf16.mxu0 0
      %2379 = vmatpush1.bf16.msra.mxu0 %v2164
      %2380 = vmatprep.subr.bf16.mxu0 0
      %2381 = vmatpush1.bf16.msra.mxu0 %v2167
      %2382 = vmatprep.mubr.bf16.mxu0 %v1776
      %2383 = vmatmul.mubr.bf16.gmra.mrb[0].mxu0 %v1775
      %v2384 = vpop.f32.mrb[0].mxu0
      %v2385 = vadd.f32 %v1876, %v2384
      %v2386 = vpop.f32.mrb[0].mxu0
      %v2387 = vpop.f32.mrb[0].mxu0
      %v2388 = vadd.f32 %v1879, %v2387
      %v2389 = vpop.f32.mrb[0].mxu0
      %2390 = vdwg.mxu0
      %2391 = vmatprep.subr.bf16.mxu0 0
      %2392 = vmatpush1.bf16.msra.mxu0 %v2170
      %2393 = vmatprep.subr.bf16.mxu0 0
      %2394 = vmatpush1.bf16.msra.mxu0 %v2173
      %2395 = vmatprep.subr.bf16.mxu0 0
      %2396 = vmatpush1.bf16.msra.mxu0 %v2176
      %2397 = vmatprep.subr.bf16.mxu0 0
      %2398 = vmatpush1.bf16.msra.mxu0 %v2179
      %2399 = vmatprep.subr.bf16.mxu0 0
      %2400 = vmatpush1.bf16.msra.mxu0 %v2182
      %2401 = vmatprep.subr.bf16.mxu0 0
      %2402 = vmatpush1.bf16.msra.mxu0 %v2185
      %2403 = vmatprep.subr.bf16.mxu0 0
      %2404 = vmatpush1.bf16.msra.mxu0 %v2188
      %2405 = vmatprep.subr.bf16.mxu0 0
      %2406 = vmatpush1.bf16.msra.mxu0 %v2191
      %2407 = vmatprep.subr.bf16.mxu0 0
      %2408 = vmatpush1.bf16.msra.mxu0 0
      %2409 = vmatprep.subr.bf16.mxu0 0
      %2410 = vmatpush1.bf16.msra.mxu0 0
      %2411 = vmatprep.subr.bf16.mxu0 0
      %2412 = vmatpush1.bf16.msra.mxu0 0
      %2413 = vmatprep.subr.bf16.mxu0 0
      %2414 = vmatpush1.bf16.msra.mxu0 0
      %2415 = vmatprep.subr.bf16.mxu0 0
      %2416 = vmatpush1.bf16.msra.mxu0 0
      %2417 = vmatprep.subr.bf16.mxu0 0
      %2418 = vmatpush1.bf16.msra.mxu0 0
      %2419 = vmatprep.subr.bf16.mxu0 0
      %2420 = vmatpush1.bf16.msra.mxu0 0
      %2421 = vmatprep.subr.bf16.mxu0 0
      %2422 = vmatpush1.bf16.msra.mxu0 0
      %2423 = vmatprep.mubr.bf16.mxu0 0
      %2424 = vmatmul.mubr.bf16.gmra.mrb[0].mxu0 %v1777
      %v2425 = vpop.f32.mrb[0].mxu0
      %v2426 = vadd.f32 %v2385, %v2425
      %v2427 = vpop.f32.mrb[0].mxu0
      %v2428 = vpop.f32.mrb[0].mxu0
      %v2429 = vadd.f32 %v2388, %v2428
      %v2430 = vpop.f32.mrb[0].mxu0
      %2431 = vdwg.mxu0
      %v2432 = vmax.f32 %v2342, %v2426
      %v2433 = vmax.f32 %v2432, %v2344
      %2434 = vmax.xlane.f32.xlu0 %v2433
      %v2435 = vpop.xlane.xlu0 %2434
      %v2436 = vmax.f32 %v2346, %v2429
      %v2437 = vmax.f32 %v2436, %v2348
      %2438 = vmax.xlane.f32.xlu0 %v2437
      %v2439 = vpop.xlane.xlu0 %2438
      %v2440 = vsub.f32 %v2342, %v2435
      %v2441 = vsub.f32 %v2344, %v2435
      %v2442 = vsub.f32 %v2426, %v2435
      %v2443 = vsub.f32 %v2346, %v2439
      %v2444 = vsub.f32 %v2348, %v2439
      %v2445 = vsub.f32 %v2429, %v2439
      %v2446 = vmul.f32 %v2440, 1.442695
      %v2447 = vpow.pop %v2446
      %v2448 = vmul.f32 %v2441, 1.442695
      %v2449 = vpow.pop %v2448
      %v2450 = vmul.f32 %v2442, 1.442695
      %v2451 = vpow.pop %v2450
      %v2452 = vmul.f32 %v2443, 1.442695
      %v2453 = vpow.pop %v2452
      %v2454 = vmul.f32 %v2444, 1.442695
      %v2455 = vpow.pop %v2454
      %v2456 = vmul.f32 %v2445, 1.442695
      %v2457 = vpow.pop %v2456
      %v2458 = vadd.f32 %v2447, %v2449
      %v2459 = vadd.f32 %v2458, %v2451
      %2460 = vadd.xlane.f32.xlu0 %v2459
      %v2461 = vpop.xlane.xlu0 %2460
      %v2462 = vadd.f32 %v2453, %v2455
      %v2463 = vadd.f32 %v2462, %v2457
      %2464 = vadd.xlane.f32.xlu0 %v2463
      %v2465 = vpop.xlane.xlu0 %2464
      %v2466 = vlog2.pop %v2461
      %v2467 = vmul.f32 %v2466, 0.6931472
      %v2468 = vlog2.pop %v2465
      %v2469 = vmul.f32 %v2468, 0.6931472
      %v2470 = vsub.f32 %v2440, %v2467
      %v2471 = vsub.f32 %v2441, %v2467
      %v2472 = vsub.f32 %v2442, %v2467
      %v2473 = vsub.f32 %v2443, %v2469
      %v2474 = vsub.f32 %v2444, %v2469
      %v2475 = vsub.f32 %v2445, %v2469
      %2476 = vst [vmem:[#allocation11] sm:$0xff] %v2470
      %2477 = vst [vmem:[#allocation11 + $0x8] sm:$0xff] %v2471
      %2478 = vst [vmem:[#allocation11 + $0x10] sm:$0xff] %v2472
      %2479 = vst [vmem:[#allocation11 + $0x18] sm:$0xff] %v2473
      %2480 = vst [vmem:[#allocation11 + $0x20] sm:$0xff] %v2474
      %2481 = vst [vmem:[#allocation11 + $0x28] sm:$0xff] %v2475
    $region41: #{tpu_custom_call.1} parent=1 // pred_fallthru
      _
    // Predicated region
    $region42: #{tpu_custom_call.1} parent=1 // pred_check
      _
    $region43: #{tpu_custom_call.1} parent=1 // pred_check_branch
      %2483 = sbr.rel (0) target = $region45
    $region44: #{tpu_custom_call.1} parent=1 // pred_region
      %s2485 = ssub.s32 768, 768
      %2486 = vsyncadd [#allocation5], %s2485
      %s2487 = sshll.u32 [#allocation11], 4
      %s2488 = int_to_ptr.vmem [resolvable:$true] %s2487
      %2493 = dma.vmem_to_hbm [thread:$0]  %s2488, 768, %s4, [#allocation5], 384, 384, 24
    $region45: #{tpu_custom_call.1} parent=1 // pred_fallthru
      _
    // Predicated region
    $region46: #{tpu_custom_call.1} parent=1 // pred_check
      _
    $region47: #{tpu_custom_call.1} parent=1 // pred_check_branch
      %2495 = sbr.rel (0) target = $region49
    $region48: #{tpu_custom_call.1} parent=1 // pred_region
      %2496 = dma.done [#allocation5], 768
    $region49: #{tpu_custom_call.1} parent=1 // pred_fallthru
      _
    %2497 = vsyncpa [#allocation4], 1
    %2498 = vsyncpa [#allocation7], 1
    %2499 = vsyncpa [#allocation10], 1
    %2500 = vsyncpa [#allocation5], 1

</llo_original>
